<compile_context>
chip_gen: v6e
topology: v6e:2x2x1
jax: 0.10.0
libtpu: 0.0.40
codegen_flags: <defaults>
</compile_context>

<pallas_src>
import jax
import jax.numpy as jnp
from jax import lax
from jax.experimental import pallas as pl
from jax.experimental.pallas import tpu as pltpu


# ---------------- fused kernel: conv(+flatten) -> fc1 -> fc2 -> logsoftmax --------
def _fused_kernel(x_ref, wc_ref, bc_ref, w1_ref, b1_ref, w2_ref, b2_ref, o_ref):
    # Conv folded into one lane-dense MXU matmul; f32 accumulation.
    f = jnp.dot(x_ref[...], wc_ref[...], preferred_element_type=jnp.float32)
    f = jnp.maximum(f + bc_ref[...], 0.0)                      # (TB, Fp) f32
    f_lo = f.astype(w1_ref.dtype)                              # bf16 MXU operand

    tb = f.shape[0]
    hid = w1_ref.shape[1]
    cp = w2_ref.shape[1]
    ch = 128 if hid % 128 == 0 else hid                        # HID strip width

    # fc1+relu and fc2 accumulated strip-by-strip over HID to limit live vregs.
    z = jnp.zeros((tb, cp), jnp.float32)
    for c in range(hid // ch):
        lo, hi = c * ch, (c + 1) * ch
        h = jnp.dot(f_lo, w1_ref[:, lo:hi], preferred_element_type=jnp.float32)
        h = jnp.maximum(h + b1_ref[:, lo:hi], 0.0)             # (TB, ch) f32
        z = z + jnp.dot(h.astype(w2_ref.dtype), w2_ref[lo:hi, :],
                        preferred_element_type=jnp.float32)
    z = z + b2_ref[...]                                        # padded lanes -> -1e30

    # Lane-dense log-softmax; padded lanes contribute exp(-huge)=0 exactly.
    m = jnp.max(z, axis=-1, keepdims=True)
    s = z - m
    lse = jnp.log(jnp.sum(jnp.exp(s), axis=-1, keepdims=True))
    o_ref[...] = s - lse


# ---------------- glue: fold conv + PyTorch flatten into one matmul ---------------
def _conv_as_matmul(w_conv, b_conv, slice_len, num_feats):
    """Build (W_eff, b_eff) with flatten(conv2d(x)) == x_flat @ W_eff + b_eff.

    x_flat = x.reshape(B, SL*W); output feature order is PyTorch's (OC, OH, OW)
    flatten(1) order:  j = (oc*OH + oh)*W + w.
    """
    OC, IC, KH, KW = w_conv.shape
    assert IC == 1 and KW == 1, "folding assumes numChannels==1, kernel width==1"
    SL, W = slice_len, num_feats
    OH = SL - KH + 1
    F = OC * OH * W
    K0 = SL * W
    wc = w_conv.reshape(OC, KH).astype(jnp.float32)

    fidx = jnp.arange(F)
    oc_idx = fidx // (OH * W)
    oh_idx = (fidx // W) % OH
    w_out = fidx % W
    kidx = jnp.arange(K0)
    ih_idx = kidx // W
    w_in = kidx % W

    kh = ih_idx[:, None] - oh_idx[None, :]                     # (K0, F)
    valid = (kh >= 0) & (kh < KH) & (w_in[:, None] == w_out[None, :])
    wvals = wc[oc_idx[None, :], jnp.clip(kh, 0, KH - 1)]       # (K0, F)
    w_eff = jnp.where(valid, wvals, 0.0).astype(jnp.float32)   # (K0, F)
    b_eff = b_conv.astype(jnp.float32)[oc_idx].reshape(1, F)   # (1, F)
    return w_eff, b_eff


# ---------------- one-time parameter preprocessing (cache the result) -------------
def prepare_params(params, slice_len, num_feats, *, weight_dtype=jnp.bfloat16):
    """Fold conv+flatten, transpose/pad/cast fc weights.  Call ONCE per model."""
    w_conv, b_conv, w1, b1, w2, b2 = params
    w_eff, b_eff = _conv_as_matmul(w_conv, b_conv, slice_len, num_feats)
    F = w_eff.shape[1]
    HID = w1.shape[0]
    C = w2.shape[0]
    Fp = ((F + 127) // 128) * 128                              # 340 -> 384
    Cp = ((C + 127) // 128) * 128                              # 3   -> 128

    w1t = w1.T.astype(jnp.float32)                             # (F, HID)
    if Fp != F:                                                # exact zero padding
        w_eff = jnp.pad(w_eff, ((0, 0), (0, Fp - F)))
        b_eff = jnp.pad(b_eff, ((0, 0), (0, Fp - F)))
        w1t = jnp.pad(w1t, ((0, Fp - F), (0, 0)))

    w2t = w2.T.astype(jnp.float32)                             # (HID, C)
    b2r = b2.reshape(1, C).astype(jnp.float32)
    if Cp != C:                                                # lane-dense fc2 output
        w2t = jnp.pad(w2t, ((0, 0), (0, Cp - C)))              # zero columns
        b2r = jnp.pad(b2r, ((0, 0), (0, Cp - C)), constant_values=-1e30)

    return (w_eff.astype(weight_dtype), b_eff.astype(jnp.float32),
            w1t.astype(weight_dtype), b1.reshape(1, HID).astype(jnp.float32),
            w2t.astype(weight_dtype), b2r)


# --------------------------------- forward ----------------------------------------
def convnn_forward(x, prepared, *, classes, tile_b=256):
    """x: (B, slice_len, num_feats) float32 -> (B, classes) log-probs."""
    w_eff, b_eff, w1t, b1r, w2t, b2r = prepared
    B = x.shape[0]
    K0 = w_eff.shape[0]
    Fp = w_eff.shape[1]
    HID = w1t.shape[1]
    Cp = w2t.shape[1]

    x_flat = x.reshape(B, -1).astype(w_eff.dtype)              # bf16 stream
    assert x_flat.shape[1] == K0, (x_flat.shape, K0)

    # Batch tiling: single full-dim block for small B; >=2 parallel steps (v7x's
    # two TensorCores) once B is large enough.  Ragged tails handled by Pallas.
    tile_b = ((tile_b + 15) // 16) * 16
    if B < 64:
        TB = B
    else:
        half = -(-B // 2)
        TB = min(tile_b, ((half + 15) // 16) * 16)
    grid = (pl.cdiv(B, TB),)

    flops = 2 * B * (K0 * Fp + Fp * HID + HID * Cp)
    bytes_accessed = (x_flat.size * x_flat.dtype.itemsize
                      + sum(a.size * a.dtype.itemsize for a in prepared)
                      + B * Cp * 4)
    cost = pl.CostEstimate(flops=flops, transcendentals=B * (Cp + 1),
                           bytes_accessed=bytes_accessed)

    out = pl.pallas_call(
        _fused_kernel,
        out_shape=jax.ShapeDtypeStruct((B, Cp), jnp.float32),
        grid=grid,
        in_specs=[
            pl.BlockSpec((TB, K0), lambda i: (i, 0)),      # x tile (K0 NOT padded)
            pl.BlockSpec((K0, Fp), lambda i: (0, 0)),      # conv-as-matmul weight
            pl.BlockSpec((1, Fp), lambda i: (0, 0)),       # conv bias (flattened)
            pl.BlockSpec((Fp, HID), lambda i: (0, 0)),     # fc1 weight (padded K)
            pl.BlockSpec((1, HID), lambda i: (0, 0)),      # fc1 bias
            pl.BlockSpec((HID, Cp), lambda i: (0, 0)),     # fc2 weight (lane-dense)
            pl.BlockSpec((1, Cp), lambda i: (0, 0)),       # fc2 bias (-1e30 pad)
        ],
        out_specs=pl.BlockSpec((TB, Cp), lambda i: (i, 0)),
        compiler_params=pltpu.CompilerParams(dimension_semantics=("parallel",)),
        cost_estimate=cost,
    )(x_flat, w_eff, b_eff, w1t, b1r, w2t, b2r)
    return out[:, :classes]


# ------------------------------ parameter init ------------------------------------
def init_params(key, num_channels=1, slice_len=4, num_feats=17, classes=3):
    KH, OC, HID = 4, 20, 512
    OH = slice_len - KH + 1
    flat = OC * OH * num_feats
    ks = jax.random.split(key, 6)

    def u(k, shape, fan_in):
        bound = 1.0 / jnp.sqrt(jnp.float32(fan_in))
        return jax.random.uniform(k, shape, jnp.float32, -bound, bound)

    w_conv = u(ks[0], (OC, num_channels, KH, 1), num_channels * KH)
    b_conv = u(ks[1], (OC,), num_channels * KH)
    w1 = u(ks[2], (HID, flat), flat)
    b1 = u(ks[3], (HID,), flat)
    w2 = u(ks[4], (classes, HID), HID)
    b2 = u(ks[5], (classes,), HID)
    return (w_conv, b_conv, w1, b1, w2, b2)


# ------------------------------ pure-JAX reference --------------------------------
def reference(x, params):
    w_conv, b_conv, w1, b1, w2, b2 = params
    B = x.shape[0]
    xr = x.reshape(B, 1, x.shape[1], x.shape[2])
    conv = lax.conv_general_dilated(
        xr, w_conv, window_strides=(1, 1), padding="VALID",
        dimension_numbers=("NCHW", "OIHW", "NCHW"))
    conv = conv + b_conv.reshape(1, -1, 1, 1)
    h = jnp.maximum(conv, 0.0).reshape(B, -1)
    y1 = jnp.maximum(h @ w1.T + b1, 0.0)
    y2 = y1 @ w2.T + b2
    return jax.nn.log_softmax(y2, axis=1)


if __name__ == "__main__":
    SLICE_LEN, NUM_FEATS, CLASSES = 4, 17, 3
    key = jax.random.PRNGKey(0)
    pkey, xkey, xkey2 = jax.random.split(key, 3)
    params = init_params(pkey, slice_len=SLICE_LEN, num_feats=NUM_FEATS,
                         classes=CLASSES)

    # One-time cached preprocessing (fold conv, transpose/pad/cast weights).
    prepared = jax.block_until_ready(
        prepare_params(params, SLICE_LEN, NUM_FEATS))

    fwd = jax.jit(lambda xx, pp: convnn_forward(xx, pp, classes=CLASSES))

    # Small-batch path (single full-dim block).
    B = 2
    x = jax.random.uniform(xkey, (B, SLICE_LEN, NUM_FEATS), jnp.float32)
    out = jax.block_until_ready(fwd(x, prepared))
    ref = jax.block_until_ready(reference(x, params))
    assert out.shape == (B, CLASSES), out.shape
    assert bool(jnp.all(jnp.isfinite(out)))
    # bf16 MXU operands with f32 accumulation -> bf16-level tolerance vs f32 ref.
    assert bool(jnp.allclose(out, ref, atol=3e-2, rtol=3e-2)), (out, ref)

    # Larger ragged batch: exercises the multi-step parallel grid + edge block.
    B2 = 100
    x2 = jax.random.uniform(xkey2, (B2, SLICE_LEN, NUM_FEATS), jnp.float32)
    out2 = jax.block_until_ready(fwd(x2, prepared))
    ref2 = jax.block_until_ready(reference(x2, params))
    assert out2.shape == (B2, CLASSES), out2.shape
    assert bool(jnp.all(jnp.isfinite(out2)))
    assert bool(jnp.allclose(out2, ref2, atol=3e-2, rtol=3e-2))

    print("KERNEL_OK")
</pallas_src>

<mosaic_0001>
module attributes {stable_mosaic.version = 11 : i64} {
  func.func @_fused_kernel(%arg0: i32, %arg1: memref<2x68xbf16, #tpu.memory_space<vmem>>, %arg2: memref<68x384xbf16, #tpu.memory_space<vmem>>, %arg3: memref<1x384xf32, #tpu.memory_space<vmem>>, %arg4: memref<384x512xbf16, #tpu.memory_space<vmem>>, %arg5: memref<1x512xf32, #tpu.memory_space<vmem>>, %arg6: memref<512x128xbf16, #tpu.memory_space<vmem>>, %arg7: memref<1x128xf32, #tpu.memory_space<vmem>>, %arg8: memref<2x128xf32, #tpu.memory_space<vmem>>) attributes {dimension_semantics = [#tpu.dimension_semantics<parallel>], iteration_bounds = array<i64: 1>, scalar_prefetch = 0 : i64, scratch_operands = 0 : i64, tpu.core_type = #tpu.core_type<tc>, window_params = [{transform_indices = @transform_0, window_bounds = array<i64: 2, 68>}, {pipeline_mode = #tpu.pipeline_mode<synchronous>, transform_indices = @transform_1, window_bounds = array<i64: 68, 384>}, {pipeline_mode = #tpu.pipeline_mode<synchronous>, transform_indices = @transform_2, window_bounds = array<i64: 1, 384>}, {pipeline_mode = #tpu.pipeline_mode<synchronous>, transform_indices = @transform_3, window_bounds = array<i64: 384, 512>}, {pipeline_mode = #tpu.pipeline_mode<synchronous>, transform_indices = @transform_4, window_bounds = array<i64: 1, 512>}, {pipeline_mode = #tpu.pipeline_mode<synchronous>, transform_indices = @transform_5, window_bounds = array<i64: 512, 128>}, {pipeline_mode = #tpu.pipeline_mode<synchronous>, transform_indices = @transform_6, window_bounds = array<i64: 1, 128>}, {transform_indices = @transform_7, window_bounds = array<i64: 2, 128>}]} {
    %c0 = arith.constant 0 : index
    %c0_0 = arith.constant 0 : index
    %0 = vector.load %arg1[%c0, %c0_0] : memref<2x68xbf16, #tpu.memory_space<vmem>>, vector<2x68xbf16>
    %c0_1 = arith.constant 0 : index
    %c0_2 = arith.constant 0 : index
    %1 = vector.load %arg2[%c0_1, %c0_2] : memref<68x384xbf16, #tpu.memory_space<vmem>>, vector<68x384xbf16>
    %cst = arith.constant dense<0.000000e+00> : vector<2x384xf32>
    %2 = tpu.matmul %0, %1, %cst {dimension_numbers = #tpu.dot_dimension_numbers<[1], [0], [0], [1], [0, 0, 1, 1], [], []>} : vector<2x68xbf16>, vector<68x384xbf16>, vector<2x384xf32> -> vector<2x384xf32>
    %c0_3 = arith.constant 0 : index
    %c0_4 = arith.constant 0 : index
    %3 = vector.load %arg3[%c0_3, %c0_4] : memref<1x384xf32, #tpu.memory_space<vmem>>, vector<1x384xf32>
    %4 = vector.broadcast %3 : vector<1x384xf32> to vector<2x384xf32>
    %5 = arith.addf %2, %4 : vector<2x384xf32>
    %cst_5 = arith.constant 0.000000e+00 : f32
    %6 = vector.broadcast %cst_5 : f32 to vector<2x384xf32>
    %7 = arith.maximumf %5, %6 : vector<2x384xf32>
    %8 = arith.truncf %7 : vector<2x384xf32> to vector<2x384xbf16>
    %cst_6 = arith.constant 0.000000e+00 : f32
    %9 = vector.broadcast %cst_6 : f32 to vector<2x128xf32>
    %c0_7 = arith.constant 0 : index
    %c0_8 = arith.constant 0 : index
    %10 = vector.load %arg4[%c0_7, %c0_8] : memref<384x512xbf16, #tpu.memory_space<vmem>>, vector<384x128xbf16>
    %cst_9 = arith.constant dense<0.000000e+00> : vector<2x128xf32>
    %11 = tpu.matmul %8, %10, %cst_9 {dimension_numbers = #tpu.dot_dimension_numbers<[1], [0], [0], [1], [0, 0, 1, 1], [], []>} : vector<2x384xbf16>, vector<384x128xbf16>, vector<2x128xf32> -> vector<2x128xf32>
    %c0_10 = arith.constant 0 : index
    %c0_11 = arith.constant 0 : index
    %12 = vector.load %arg5[%c0_10, %c0_11] : memref<1x512xf32, #tpu.memory_space<vmem>>, vector<1x128xf32>
    %13 = vector.broadcast %12 : vector<1x128xf32> to vector<2x128xf32>
    %14 = arith.addf %11, %13 : vector<2x128xf32>
    %cst_12 = arith.constant 0.000000e+00 : f32
    %15 = vector.broadcast %cst_12 : f32 to vector<2x128xf32>
    %16 = arith.maximumf %14, %15 : vector<2x128xf32>
    %17 = arith.truncf %16 : vector<2x128xf32> to vector<2x128xbf16>
    %c0_13 = arith.constant 0 : index
    %c0_14 = arith.constant 0 : index
    %18 = vector.load %arg6[%c0_13, %c0_14] : memref<512x128xbf16, #tpu.memory_space<vmem>>, vector<128x128xbf16>
    %cst_15 = arith.constant dense<0.000000e+00> : vector<2x128xf32>
    %19 = tpu.matmul %17, %18, %cst_15 {dimension_numbers = #tpu.dot_dimension_numbers<[1], [0], [0], [1], [0, 0, 1, 1], [], []>} : vector<2x128xbf16>, vector<128x128xbf16>, vector<2x128xf32> -> vector<2x128xf32>
    %20 = arith.addf %9, %19 : vector<2x128xf32>
    %c0_16 = arith.constant 0 : index
    %c128 = arith.constant 128 : index
    %21 = vector.load %arg4[%c0_16, %c128] : memref<384x512xbf16, #tpu.memory_space<vmem>>, vector<384x128xbf16>
    %cst_17 = arith.constant dense<0.000000e+00> : vector<2x128xf32>
    %22 = tpu.matmul %8, %21, %cst_17 {dimension_numbers = #tpu.dot_dimension_numbers<[1], [0], [0], [1], [0, 0, 1, 1], [], []>} : vector<2x384xbf16>, vector<384x128xbf16>, vector<2x128xf32> -> vector<2x128xf32>
    %c0_18 = arith.constant 0 : index
    %c128_19 = arith.constant 128 : index
    %23 = vector.load %arg5[%c0_18, %c128_19] : memref<1x512xf32, #tpu.memory_space<vmem>>, vector<1x128xf32>
    %24 = vector.broadcast %23 : vector<1x128xf32> to vector<2x128xf32>
    %25 = arith.addf %22, %24 : vector<2x128xf32>
    %cst_20 = arith.constant 0.000000e+00 : f32
    %26 = vector.broadcast %cst_20 : f32 to vector<2x128xf32>
    %27 = arith.maximumf %25, %26 : vector<2x128xf32>
    %28 = arith.truncf %27 : vector<2x128xf32> to vector<2x128xbf16>
    %c128_21 = arith.constant 128 : index
    %c0_22 = arith.constant 0 : index
    %29 = vector.load %arg6[%c128_21, %c0_22] : memref<512x128xbf16, #tpu.memory_space<vmem>>, vector<128x128xbf16>
    %cst_23 = arith.constant dense<0.000000e+00> : vector<2x128xf32>
    %30 = tpu.matmul %28, %29, %cst_23 {dimension_numbers = #tpu.dot_dimension_numbers<[1], [0], [0], [1], [0, 0, 1, 1], [], []>} : vector<2x128xbf16>, vector<128x128xbf16>, vector<2x128xf32> -> vector<2x128xf32>
    %31 = arith.addf %20, %30 : vector<2x128xf32>
    %c0_24 = arith.constant 0 : index
    %c256 = arith.constant 256 : index
    %32 = vector.load %arg4[%c0_24, %c256] : memref<384x512xbf16, #tpu.memory_space<vmem>>, vector<384x128xbf16>
    %cst_25 = arith.constant dense<0.000000e+00> : vector<2x128xf32>
    %33 = tpu.matmul %8, %32, %cst_25 {dimension_numbers = #tpu.dot_dimension_numbers<[1], [0], [0], [1], [0, 0, 1, 1], [], []>} : vector<2x384xbf16>, vector<384x128xbf16>, vector<2x128xf32> -> vector<2x128xf32>
    %c0_26 = arith.constant 0 : index
    %c256_27 = arith.constant 256 : index
    %34 = vector.load %arg5[%c0_26, %c256_27] : memref<1x512xf32, #tpu.memory_space<vmem>>, vector<1x128xf32>
    %35 = vector.broadcast %34 : vector<1x128xf32> to vector<2x128xf32>
    %36 = arith.addf %33, %35 : vector<2x128xf32>
    %cst_28 = arith.constant 0.000000e+00 : f32
    %37 = vector.broadcast %cst_28 : f32 to vector<2x128xf32>
    %38 = arith.maximumf %36, %37 : vector<2x128xf32>
    %39 = arith.truncf %38 : vector<2x128xf32> to vector<2x128xbf16>
    %c256_29 = arith.constant 256 : index
    %c0_30 = arith.constant 0 : index
    %40 = vector.load %arg6[%c256_29, %c0_30] : memref<512x128xbf16, #tpu.memory_space<vmem>>, vector<128x128xbf16>
    %cst_31 = arith.constant dense<0.000000e+00> : vector<2x128xf32>
    %41 = tpu.matmul %39, %40, %cst_31 {dimension_numbers = #tpu.dot_dimension_numbers<[1], [0], [0], [1], [0, 0, 1, 1], [], []>} : vector<2x128xbf16>, vector<128x128xbf16>, vector<2x128xf32> -> vector<2x128xf32>
    %42 = arith.addf %31, %41 : vector<2x128xf32>
    %c0_32 = arith.constant 0 : index
    %c384 = arith.constant 384 : index
    %43 = vector.load %arg4[%c0_32, %c384] : memref<384x512xbf16, #tpu.memory_space<vmem>>, vector<384x128xbf16>
    %cst_33 = arith.constant dense<0.000000e+00> : vector<2x128xf32>
    %44 = tpu.matmul %8, %43, %cst_33 {dimension_numbers = #tpu.dot_dimension_numbers<[1], [0], [0], [1], [0, 0, 1, 1], [], []>} : vector<2x384xbf16>, vector<384x128xbf16>, vector<2x128xf32> -> vector<2x128xf32>
    %c0_34 = arith.constant 0 : index
    %c384_35 = arith.constant 384 : index
    %45 = vector.load %arg5[%c0_34, %c384_35] : memref<1x512xf32, #tpu.memory_space<vmem>>, vector<1x128xf32>
    %46 = vector.broadcast %45 : vector<1x128xf32> to vector<2x128xf32>
    %47 = arith.addf %44, %46 : vector<2x128xf32>
    %cst_36 = arith.constant 0.000000e+00 : f32
    %48 = vector.broadcast %cst_36 : f32 to vector<2x128xf32>
    %49 = arith.maximumf %47, %48 : vector<2x128xf32>
    %50 = arith.truncf %49 : vector<2x128xf32> to vector<2x128xbf16>
    %c384_37 = arith.constant 384 : index
    %c0_38 = arith.constant 0 : index
    %51 = vector.load %arg6[%c384_37, %c0_38] : memref<512x128xbf16, #tpu.memory_space<vmem>>, vector<128x128xbf16>
    %cst_39 = arith.constant dense<0.000000e+00> : vector<2x128xf32>
    %52 = tpu.matmul %50, %51, %cst_39 {dimension_numbers = #tpu.dot_dimension_numbers<[1], [0], [0], [1], [0, 0, 1, 1], [], []>} : vector<2x128xbf16>, vector<128x128xbf16>, vector<2x128xf32> -> vector<2x128xf32>
    %53 = arith.addf %42, %52 : vector<2x128xf32>
    %c0_40 = arith.constant 0 : index
    %c0_41 = arith.constant 0 : index
    %54 = vector.load %arg7[%c0_40, %c0_41] : memref<1x128xf32, #tpu.memory_space<vmem>>, vector<1x128xf32>
    %55 = vector.broadcast %54 : vector<1x128xf32> to vector<2x128xf32>
    %56 = arith.addf %53, %55 : vector<2x128xf32>
    %cst_42 = arith.constant dense<0xFF800000> : vector<2xf32>
    %57 = vector.multi_reduction <maximumf>, %56, %cst_42 [1] : vector<2x128xf32> to vector<2xf32>
    %58 = vector.shape_cast %57 : vector<2xf32> to vector<2x1xf32>
    %59 = vector.broadcast %58 : vector<2x1xf32> to vector<2x128xf32>
    %60 = arith.subf %56, %59 : vector<2x128xf32>
    %61 = math.exp %60 : vector<2x128xf32>
    %cst_43 = arith.constant dense<0.000000e+00> : vector<2xf32>
    %62 = vector.multi_reduction <add>, %61, %cst_43 [1] : vector<2x128xf32> to vector<2xf32>
    %63 = vector.shape_cast %62 : vector<2xf32> to vector<2x1xf32>
    %64 = math.log %63 : vector<2x1xf32>
    %65 = vector.broadcast %64 : vector<2x1xf32> to vector<2x128xf32>
    %66 = arith.subf %60, %65 : vector<2x128xf32>
    %c0_44 = arith.constant 0 : index
    %c0_45 = arith.constant 0 : index
    %67 = vector.load %arg8[%c0_44, %c0_45] : memref<2x128xf32, #tpu.memory_space<vmem>>, vector<2x128xf32>
    tpu.vector_store %arg8[%c0_44, %c0_45], %66 {strides = array<i32>} : memref<2x128xf32, #tpu.memory_space<vmem>>, vector<2x128xf32>,
    return
  }
  func.func @transform_0(%arg0: i32) -> (i32, i32) {
    %c0_i32 = arith.constant 0 : i32
    %c0_i32_0 = arith.constant 0 : i32
    return %arg0, %c0_i32 : i32, i32
  }
  func.func @transform_1(%arg0: i32) -> (i32, i32) {
    %c0_i32 = arith.constant 0 : i32
    %c0_i32_0 = arith.constant 0 : i32
    %c0_i32_1 = arith.constant 0 : i32
    return %c0_i32, %c0_i32_0 : i32, i32
  }
  func.func @transform_2(%arg0: i32) -> (i32, i32) {
    %c0_i32 = arith.constant 0 : i32
    %c0_i32_0 = arith.constant 0 : i32
    %c0_i32_1 = arith.constant 0 : i32
    return %c0_i32, %c0_i32_0 : i32, i32
  }
  func.func @transform_3(%arg0: i32) -> (i32, i32) {
    %c0_i32 = arith.constant 0 : i32
    %c0_i32_0 = arith.constant 0 : i32
    %c0_i32_1 = arith.constant 0 : i32
    return %c0_i32, %c0_i32_0 : i32, i32
  }
  func.func @transform_4(%arg0: i32) -> (i32, i32) {
    %c0_i32 = arith.constant 0 : i32
    %c0_i32_0 = arith.constant 0 : i32
    %c0_i32_1 = arith.constant 0 : i32
    return %c0_i32, %c0_i32_0 : i32, i32
  }
  func.func @transform_5(%arg0: i32) -> (i32, i32) {
    %c0_i32 = arith.constant 0 : i32
    %c0_i32_0 = arith.constant 0 : i32
    %c0_i32_1 = arith.constant 0 : i32
    return %c0_i32, %c0_i32_0 : i32, i32
  }
  func.func @transform_6(%arg0: i32) -> (i32, i32) {
    %c0_i32 = arith.constant 0 : i32
    %c0_i32_0 = arith.constant 0 : i32
    %c0_i32_1 = arith.constant 0 : i32
    return %c0_i32, %c0_i32_0 : i32, i32
  }
  func.func @transform_7(%arg0: i32) -> (i32, i32) {
    %c0_i32 = arith.constant 0 : i32
    %c0_i32_0 = arith.constant 0 : i32
    return %arg0, %c0_i32 : i32, i32
  }
}

</mosaic_0001>

<llo_original>
// kernel: _lambda_.1
$region0: #{_lambda_.1}
  #allocation0 [shape = 'u32[]', space=smem, size = 0x4, offset = 0x4, fixed_abs, tag = 'smem constant byte address 0x4 - core index']
  #allocation1 [shape = 'u32[144,128]{1,0:T(1,128)}', space=vmem, size = 0x12000, scoped, tag = 'internal scratch']
  %s0 = inlined_call_operand.vmem [shape: bf16[2,68], index: 0, kind: input, shape index: {}]
  %s1 = inlined_call_operand.hbm [shape: bf16[68,384], index: 1, kind: input, shape index: {}]
  %s2 = inlined_call_operand.vmem [shape: f32[1,384], index: 2, kind: input, shape index: {}]
  %s3 = inlined_call_operand.hbm [shape: bf16[384,512], index: 3, kind: input, shape index: {}]
  %s4 = inlined_call_operand.vmem [shape: f32[1,512], index: 4, kind: input, shape index: {}]
  %s5 = inlined_call_operand.hbm [shape: bf16[512,128], index: 5, kind: input, shape index: {}]
  %s6 = inlined_call_operand.vmem [shape: f32[1,128], index: 6, kind: input, shape index: {}]
  %s7 = inlined_call_operand.hbm [shape: f32[2,128], index: 7, kind: output, shape index: {}]
  %s8 = sld [smem:[#allocation0]]
  $region50: #{_lambda_.1} parent=0
    _
  %s10 = ssub.s32 1, %s8
  %s11 = scalar_select 0, %s10, %s8
  $region1: #{_lambda_.1} parent=0
    #allocation2 [shape = 'u8[55296]{0}', space=vmem, size = 0xd800, scoped, tag = 'input window, operand 1, single buffered']
    #allocation3 [shape = 's32[1]{0}', space=sflag, size = 0x4, scoped, tag = 'scoped memory for _lambda_.1']
    #allocation4 [shape = 's32[1]{0}', space=sflag, size = 0x4, scoped, tag = 'scoped memory for _lambda_.1']
    #allocation5 [shape = 'u8[393216]{0}', space=vmem, size = 0x60000, scoped, tag = 'input window, operand 3, single buffered']
    #allocation6 [shape = 's32[1]{0}', space=sflag, size = 0x4, scoped, tag = 'scoped memory for _lambda_.1']
    #allocation7 [shape = 'u8[131072]{0}', space=vmem, size = 0x20000, scoped, tag = 'input window, operand 5, single buffered']
    #allocation8 [shape = 'u8[1024]{0}', space=vmem, size = 0x400, scoped, tag = 'output window, operand 0, single buffered']
    %12 = vsyncpa [#allocation3], 0
    %13 = vsyncpa [#allocation6], 0
    %14 = vsyncpa [#allocation4], 0
    // Predicated region
    $region2: #{_lambda_.1} parent=1 // pred_check
      _
    $region3: #{_lambda_.1} parent=1 // pred_check_branch
      %16 = sbr.rel (0) target = $region5
    $region4: #{_lambda_.1} parent=1 // pred_region
      _
    $region5: #{_lambda_.1} parent=1 // pred_fallthru
      _
    // Predicated region
    $region6: #{_lambda_.1} parent=1 // pred_check
      _
    $region7: #{_lambda_.1} parent=1 // pred_check_branch
      %18 = sbr.rel (0) target = $region9
    $region8: #{_lambda_.1} parent=1 // pred_region
      %s20 = ssub.s32 1728, 1728
      %21 = vsyncadd [#allocation3], %s20
      %s22 = sshll.u32 [#allocation2], 4
      %s23 = int_to_ptr.vmem [resolvable:$true] %s22
      %28 = dma.hbm_to_vmem [thread:$0]  %s1, 1728, %s23, [#allocation3], 192, 192, 12
    $region9: #{_lambda_.1} parent=1 // pred_fallthru
      _
    // Predicated region
    $region10: #{_lambda_.1} parent=1 // pred_check
      _
    $region11: #{_lambda_.1} parent=1 // pred_check_branch
      %30 = sbr.rel (0) target = $region13
    $region12: #{_lambda_.1} parent=1 // pred_region
      _
    $region13: #{_lambda_.1} parent=1 // pred_fallthru
      _
    // Predicated region
    $region14: #{_lambda_.1} parent=1 // pred_check
      _
    $region15: #{_lambda_.1} parent=1 // pred_check_branch
      %32 = sbr.rel (0) target = $region17
    $region16: #{_lambda_.1} parent=1 // pred_region
      %s34 = ssub.s32 12288, 12288
      %35 = vsyncadd [#allocation6], %s34
      %s36 = sshll.u32 [#allocation5], 4
      %s37 = int_to_ptr.vmem [resolvable:$true] %s36
      %42 = dma.hbm_to_vmem [thread:$0]  %s3, 12288, %s37, [#allocation6], 256, 256, 16
    $region17: #{_lambda_.1} parent=1 // pred_fallthru
      _
    // Predicated region
    $region18: #{_lambda_.1} parent=1 // pred_check
      _
    $region19: #{_lambda_.1} parent=1 // pred_check_branch
      %44 = sbr.rel (0) target = $region21
    $region20: #{_lambda_.1} parent=1 // pred_region
      _
    $region21: #{_lambda_.1} parent=1 // pred_fallthru
      _
    // Predicated region
    $region22: #{_lambda_.1} parent=1 // pred_check
      _
    $region23: #{_lambda_.1} parent=1 // pred_check_branch
      %46 = sbr.rel (0) target = $region25
    $region24: #{_lambda_.1} parent=1 // pred_region
      %s48 = ssub.s32 4096, 4096
      %49 = vsyncadd [#allocation6], %s48
      %s50 = sshll.u32 [#allocation7], 4
      %s51 = int_to_ptr.vmem [resolvable:$true] %s50
      %56 = dma.hbm_to_vmem [thread:$0]  %s5, 4096, %s51, [#allocation6], 64, 64, 4
    $region25: #{_lambda_.1} parent=1 // pred_fallthru
      _
    // Predicated region
    $region26: #{_lambda_.1} parent=1 // pred_check
      _
    $region27: #{_lambda_.1} parent=1 // pred_check_branch
      %58 = sbr.rel (0) target = $region29
    $region28: #{_lambda_.1} parent=1 // pred_region
      _
    $region29: #{_lambda_.1} parent=1 // pred_fallthru
      _
    // Predicated region
    $region30: #{_lambda_.1} parent=1 // pred_check
      _
    $region31: #{_lambda_.1} parent=1 // pred_check_branch
      %60 = sbr.rel (0) target = $region33
    $region32: #{_lambda_.1} parent=1 // pred_region
      %61 = dma.done [#allocation3], 1728
    $region33: #{_lambda_.1} parent=1 // pred_fallthru
      _
    // Predicated region
    $region34: #{_lambda_.1} parent=1 // pred_check
      _
    $region35: #{_lambda_.1} parent=1 // pred_check_branch
      %63 = sbr.rel (0) target = $region37
    $region36: #{_lambda_.1} parent=1 // pred_region
      %64 = dma.done [#allocation6], 12288
    $region37: #{_lambda_.1} parent=1 // pred_fallthru
      _
    // Predicated region
    $region38: #{_lambda_.1} parent=1 // pred_check
      _
    $region39: #{_lambda_.1} parent=1 // pred_check_branch
      %66 = sbr.rel (0) target = $region41
    $region40: #{_lambda_.1} parent=1 // pred_region
      %67 = dma.done [#allocation6], 4096
    $region41: #{_lambda_.1} parent=1 // pred_fallthru
      _
    %v69 = vld [vmem:[%s0] sm:$0x1]
    %v70 = vld [vmem:[#allocation2] sm:$0xff]
    %v71 = vld [vmem:[#allocation2 + $0x8] sm:$0xf]
    %v72 = vld [vmem:[#allocation2 + $0xc] sm:$0xff]
    %v73 = vld [vmem:[#allocation2 + $0x14] sm:$0xf]
    %v74 = vld [vmem:[#allocation2 + $0x18] sm:$0xff]
    %v75 = vld [vmem:[#allocation2 + $0x20] sm:$0xf]
    %v76 = vld [vmem:[#allocation2 + $0x24] sm:$0xff]
    %v77 = vld [vmem:[#allocation2 + $0x2c] sm:$0xf]
    %v78 = vld [vmem:[#allocation2 + $0x30] sm:$0xff]
    %v79 = vld [vmem:[#allocation2 + $0x38] sm:$0xf]
    %v80 = vld [vmem:[#allocation2 + $0x3c] sm:$0xff]
    %v81 = vld [vmem:[#allocation2 + $0x44] sm:$0xf]
    %v82 = vld [vmem:[#allocation2 + $0x48] sm:$0xff]
    %v83 = vld [vmem:[#allocation2 + $0x50] sm:$0xf]
    %v84 = vld [vmem:[#allocation2 + $0x54] sm:$0xff]
    %v85 = vld [vmem:[#allocation2 + $0x5c] sm:$0xf]
    %v86 = vld [vmem:[#allocation2 + $0x60] sm:$0x33]
    %v87 = vld [vmem:[#allocation2 + $0x68] sm:$0x3]
    %v88 = vld [vmem:[%s2] sm:$0x7]
    %v90 = vlaneseq
    %v91 = vshrl.u32 %v90, 7
    %v92 = vsub.s32 0, %v91
    %v93 = vrot.slane %v88, %v92
    %v94 = vlaneseq
    %v95 = vshrl.u32 %v94, 7
    %v96 = vsub.s32 1, %v95
    %v97 = vrot.slane %v88, %v96
    %v98 = vlaneseq
    %v99 = vshrl.u32 %v98, 7
    %v100 = vsub.s32 2, %v99
    %v101 = vrot.slane %v88, %v100
    %v123 = vunpack.c.l.b16 %v70
    %v124 = vunpack.c.h.b16 %v70
    %v125 = vunpack.c.l.b16 %v71
    %v126 = vunpack.c.l.b16 %v72
    %v127 = vunpack.c.h.b16 %v72
    %v128 = vunpack.c.l.b16 %v73
    %v129 = vunpack.c.l.b16 %v74
    %v130 = vunpack.c.h.b16 %v74
    %v131 = vunpack.c.l.b16 %v75
    %v132 = vunpack.c.l.b16 %v76
    %v133 = vunpack.c.h.b16 %v76
    %v134 = vunpack.c.l.b16 %v77
    %v135 = vunpack.c.l.b16 %v78
    %v136 = vunpack.c.h.b16 %v78
    %v137 = vunpack.c.l.b16 %v79
    %v138 = vunpack.c.l.b16 %v80
    %v139 = vunpack.c.h.b16 %v80
    %v140 = vunpack.c.l.b16 %v81
    %v141 = vunpack.c.l.b16 %v82
    %v142 = vunpack.c.h.b16 %v82
    %v143 = vunpack.c.l.b16 %v83
    %v144 = vunpack.c.l.b16 %v84
    %v145 = vunpack.c.h.b16 %v84
    %v146 = vunpack.c.l.b16 %v85
    %v147 = vunpack.c.l.b16 %v86
    %v148 = vunpack.c.h.b16 %v86
    %v149 = vunpack.c.l.b16 %v87
    %v150 = vpack.c.b16 %v126, %v123
    %v151 = vpack.c.b16 %v127, %v124
    %v152 = vpack.c.b16 %v128, %v125
    %v153 = vpack.c.b16 %v132, %v129
    %v154 = vpack.c.b16 %v133, %v130
    %v155 = vpack.c.b16 %v134, %v131
    %v156 = vpack.c.b16 %v138, %v135
    %v157 = vpack.c.b16 %v139, %v136
    %v158 = vpack.c.b16 %v140, %v137
    %v159 = vpack.c.b16 %v144, %v141
    %v160 = vpack.c.b16 %v145, %v142
    %v161 = vpack.c.b16 %v146, %v143
    %v162 = vpack.c.b16 %v147, %v147
    %v163 = vpack.c.b16 %v148, %v148
    %v164 = vpack.c.b16 %v149, %v149
    %vm177 = vcmask 556032
    %v179 = vsel %vm177, %v69, 0
    %vm181 = vcmask 1041408
    %v183 = vsel %vm181, %v162, 0
    %v186 = vsel %vm181, %v163, 0
    %v189 = vsel %vm181, %v164, 0
    %191 = vmatprep.subr.bf16.mxu0 0
    %192 = vmatpush1.bf16.msra.mxu0 0
    %193 = vmatprep.subr.bf16.mxu0 0
    %194 = vmatpush1.bf16.msra.mxu0 0
    %195 = vmatprep.subr.bf16.mxu0 0
    %196 = vmatpush1.bf16.msra.mxu0 0
    %197 = vmatprep.subr.bf16.mxu0 %v186
    %198 = vmatpush1.bf16.msra.mxu0 %v183
    %199 = vmatprep.subr.bf16.mxu0 %v160
    %200 = vmatpush1.bf16.msra.mxu0 %v159
    %201 = vmatprep.subr.bf16.mxu0 %v157
    %202 = vmatpush1.bf16.msra.mxu0 %v156
    %203 = vmatprep.subr.bf16.mxu0 %v154
    %204 = vmatpush1.bf16.msra.mxu0 %v153
    %205 = vmatprep.subr.bf16.mxu0 %v151
    %206 = vmatpush1.bf16.msra.mxu0 %v150
    %207 = vmatprep.subr.bf16.mxu0 0
    %208 = vmatpush2.bf16.msra.mxu0 0
    %209 = vmatprep.subr.bf16.mxu0 0
    %210 = vmatpush2.bf16.msra.mxu0 0
    %211 = vmatprep.subr.bf16.mxu0 0
    %212 = vmatpush2.bf16.msra.mxu0 0
    %213 = vmatprep.subr.bf16.mxu0 0
    %214 = vmatpush2.bf16.msra.mxu0 0
    %215 = vmatprep.subr.bf16.mxu0 0
    %216 = vmatpush2.bf16.msra.mxu0 0
    %217 = vmatprep.subr.bf16.mxu0 0
    %218 = vmatpush2.bf16.msra.mxu0 0
    %219 = vmatprep.subr.bf16.mxu0 0
    %220 = vmatpush2.bf16.msra.mxu0 0
    %221 = vmatprep.subr.bf16.mxu0 0
    %222 = vmatpush2.bf16.msra.mxu0 0
    %223 = vmatprep.mubr.bf16.mxu0 0
    %224 = vmatmul.mubr.bf16.gmra.mxu0 %v179
    %v225 = vpop.f32.mrf.mxu0
    %v226 = vadd.f32 %v93, %v225
    %v227 = vpop.f32.mrf.mxu0
    %v228 = vadd.f32 %v97, %v227
    %v229 = vpop.f32.mrf.mxu0
    %v230 = vpop.f32.mrf.mxu0
    %231 = vdwg.mxu0
    %232 = vmatprep.subr.bf16.mxu0 0
    %233 = vmatpush1.bf16.msra.mxu0 0
    %234 = vmatprep.subr.bf16.mxu0 0
    %235 = vmatpush1.bf16.msra.mxu0 0
    %236 = vmatprep.subr.bf16.mxu0 0
    %237 = vmatpush1.bf16.msra.mxu0 0
    %238 = vmatprep.subr.bf16.mxu0 0
    %239 = vmatpush1.bf16.msra.mxu0 %v189
    %240 = vmatprep.subr.bf16.mxu0 0
    %241 = vmatpush1.bf16.msra.mxu0 %v161
    %242 = vmatprep.subr.bf16.mxu0 0
    %243 = vmatpush1.bf16.msra.mxu0 %v158
    %244 = vmatprep.subr.bf16.mxu0 0
    %245 = vmatpush1.bf16.msra.mxu0 %v155
    %246 = vmatprep.subr.bf16.mxu0 0
    %247 = vmatpush1.bf16.msra.mxu0 %v152
    %248 = vmatprep.subr.bf16.mxu0 0
    %249 = vmatpush2.bf16.msra.mxu0 0
    %250 = vmatprep.subr.bf16.mxu0 0
    %251 = vmatpush2.bf16.msra.mxu0 0
    %252 = vmatprep.subr.bf16.mxu0 0
    %253 = vmatpush2.bf16.msra.mxu0 0
    %254 = vmatprep.subr.bf16.mxu0 0
    %255 = vmatpush2.bf16.msra.mxu0 0
    %256 = vmatprep.subr.bf16.mxu0 0
    %257 = vmatpush2.bf16.msra.mxu0 0
    %258 = vmatprep.subr.bf16.mxu0 0
    %259 = vmatpush2.bf16.msra.mxu0 0
    %260 = vmatprep.subr.bf16.mxu0 0
    %261 = vmatpush2.bf16.msra.mxu0 0
    %262 = vmatprep.subr.bf16.mxu0 0
    %263 = vmatpush2.bf16.msra.mxu0 0
    %264 = vmatprep.mubr.bf16.mxu0 0
    %265 = vmatmul.mubr.bf16.gmra.mxu0 %v179
    %v266 = vpop.f32.mrf.mxu0
    %v267 = vadd.f32 %v101, %v266
    %v268 = vpop.f32.mrf.mxu0
    %v269 = vpop.f32.mrf.mxu0
    %v270 = vpop.f32.mrf.mxu0
    %271 = vdwg.mxu0
    %v272 = vmax.f32 %v226, 0.0
    %v273 = vmax.f32 %v228, 0.0
    %v274 = vmax.f32 %v267, 0.0
    %v275 = vpack.c.bf16 %v272, %v272
    %v276 = vpack.c.bf16 %v273, %v273
    %v277 = vpack.c.bf16 %v274, %v274
    %v278 = vld [vmem:[#allocation5] sm:$0xf]
    %v279 = vld [vmem:[#allocation5 + $0x10] sm:$0xf]
    %v280 = vld [vmem:[#allocation5 + $0x20] sm:$0xf]
    %v281 = vld [vmem:[#allocation5 + $0x30] sm:$0xf]
    %v282 = vld [vmem:[#allocation5 + $0x40] sm:$0xf]
    %v283 = vld [vmem:[#allocation5 + $0x50] sm:$0xf]
    %v284 = vld [vmem:[#allocation5 + $0x60] sm:$0xf]
    %v285 = vld [vmem:[#allocation5 + $0x70] sm:$0xf]
    %v286 = vld [vmem:[#allocation5 + $0x80] sm:$0xf]
    %v287 = vld [vmem:[#allocation5 + $0x90] sm:$0xf]
    %v288 = vld [vmem:[#allocation5 + $0xa0] sm:$0xf]
    %v289 = vld [vmem:[#allocation5 + $0xb0] sm:$0xf]
    %v290 = vld [vmem:[#allocation5 + $0xc0] sm:$0xf]
    %v291 = vld [vmem:[#allocation5 + $0xd0] sm:$0xf]
    %v292 = vld [vmem:[#allocation5 + $0xe0] sm:$0xf]
    %v293 = vld [vmem:[#allocation5 + $0xf0] sm:$0xf]
    %v294 = vld [vmem:[#allocation5 + $0x100] sm:$0xf]
    %v295 = vld [vmem:[#allocation5 + $0x110] sm:$0xf]
    %v296 = vld [vmem:[#allocation5 + $0x120] sm:$0xf]
    %v297 = vld [vmem:[#allocation5 + $0x130] sm:$0xf]
    %v298 = vld [vmem:[#allocation5 + $0x140] sm:$0xf]
    %v299 = vld [vmem:[#allocation5 + $0x150] sm:$0xf]
    %v300 = vld [vmem:[#allocation5 + $0x160] sm:$0xf]
    %v301 = vld [vmem:[#allocation5 + $0x170] sm:$0xf]
    %v302 = vld [vmem:[#allocation5 + $0x180] sm:$0xf]
    %v303 = vld [vmem:[#allocation5 + $0x190] sm:$0xf]
    %v304 = vld [vmem:[#allocation5 + $0x1a0] sm:$0xf]
    %v305 = vld [vmem:[#allocation5 + $0x1b0] sm:$0xf]
    %v306 = vld [vmem:[#allocation5 + $0x1c0] sm:$0xf]
    %v307 = vld [vmem:[#allocation5 + $0x1d0] sm:$0xf]
    %v308 = vld [vmem:[#allocation5 + $0x1e0] sm:$0xf]
    %v309 = vld [vmem:[#allocation5 + $0x1f0] sm:$0xf]
    %v310 = vld [vmem:[#allocation5 + $0x200] sm:$0xf]
    %v311 = vld [vmem:[#allocation5 + $0x210] sm:$0xf]
    %v312 = vld [vmem:[#allocation5 + $0x220] sm:$0xf]
    %v313 = vld [vmem:[#allocation5 + $0x230] sm:$0xf]
    %v314 = vld [vmem:[#allocation5 + $0x240] sm:$0xf]
    %v315 = vld [vmem:[#allocation5 + $0x250] sm:$0xf]
    %v316 = vld [vmem:[#allocation5 + $0x260] sm:$0xf]
    %v317 = vld [vmem:[#allocation5 + $0x270] sm:$0xf]
    %v318 = vld [vmem:[#allocation5 + $0x280] sm:$0xf]
    %v319 = vld [vmem:[#allocation5 + $0x290] sm:$0xf]
    %v320 = vld [vmem:[#allocation5 + $0x2a0] sm:$0xf]
    %v321 = vld [vmem:[#allocation5 + $0x2b0] sm:$0xf]
    %v322 = vld [vmem:[#allocation5 + $0x2c0] sm:$0xf]
    %v323 = vld [vmem:[#allocation5 + $0x2d0] sm:$0xf]
    %v324 = vld [vmem:[#allocation5 + $0x2e0] sm:$0xf]
    %v325 = vld [vmem:[#allocation5 + $0x2f0] sm:$0xf]
    %v326 = vld [vmem:[%s4] sm:$0x1]
    %v328 = vlaneseq
    %v329 = vshrl.u32 %v328, 7
    %v330 = vsub.s32 0, %v329
    %v331 = vrot.slane %v326, %v330
    %v381 = vunpack.c.l.b16 %v278
    %v382 = vunpack.c.l.b16 %v279
    %v383 = vunpack.c.l.b16 %v280
    %v384 = vunpack.c.l.b16 %v281
    %v385 = vunpack.c.l.b16 %v282
    %v386 = vunpack.c.l.b16 %v283
    %v387 = vunpack.c.l.b16 %v284
    %v388 = vunpack.c.l.b16 %v285
    %v389 = vunpack.c.l.b16 %v286
    %v390 = vunpack.c.l.b16 %v287
    %v391 = vunpack.c.l.b16 %v288
    %v392 = vunpack.c.l.b16 %v289
    %v393 = vunpack.c.l.b16 %v290
    %v394 = vunpack.c.l.b16 %v291
    %v395 = vunpack.c.l.b16 %v292
    %v396 = vunpack.c.l.b16 %v293
    %v397 = vunpack.c.l.b16 %v294
    %v398 = vunpack.c.l.b16 %v295
    %v399 = vunpack.c.l.b16 %v296
    %v400 = vunpack.c.l.b16 %v297
    %v401 = vunpack.c.l.b16 %v298
    %v402 = vunpack.c.l.b16 %v299
    %v403 = vunpack.c.l.b16 %v300
    %v404 = vunpack.c.l.b16 %v301
    %v405 = vunpack.c.l.b16 %v302
    %v406 = vunpack.c.l.b16 %v303
    %v407 = vunpack.c.l.b16 %v304
    %v408 = vunpack.c.l.b16 %v305
    %v409 = vunpack.c.l.b16 %v306
    %v410 = vunpack.c.l.b16 %v307
    %v411 = vunpack.c.l.b16 %v308
    %v412 = vunpack.c.l.b16 %v309
    %v413 = vunpack.c.l.b16 %v310
    %v414 = vunpack.c.l.b16 %v311
    %v415 = vunpack.c.l.b16 %v312
    %v416 = vunpack.c.l.b16 %v313
    %v417 = vunpack.c.l.b16 %v314
    %v418 = vunpack.c.l.b16 %v315
    %v419 = vunpack.c.l.b16 %v316
    %v420 = vunpack.c.l.b16 %v317
    %v421 = vunpack.c.l.b16 %v318
    %v422 = vunpack.c.l.b16 %v319
    %v423 = vunpack.c.l.b16 %v320
    %v424 = vunpack.c.l.b16 %v321
    %v425 = vunpack.c.l.b16 %v322
    %v426 = vunpack.c.l.b16 %v323
    %v427 = vunpack.c.l.b16 %v324
    %v428 = vunpack.c.l.b16 %v325
    %v429 = vpack.c.b16 %v382, %v381
    %v430 = vpack.c.b16 %v384, %v383
    %v431 = vpack.c.b16 %v386, %v385
    %v432 = vpack.c.b16 %v388, %v387
    %v433 = vpack.c.b16 %v390, %v389
    %v434 = vpack.c.b16 %v392, %v391
    %v435 = vpack.c.b16 %v394, %v393
    %v436 = vpack.c.b16 %v396, %v395
    %v437 = vpack.c.b16 %v398, %v397
    %v438 = vpack.c.b16 %v400, %v399
    %v439 = vpack.c.b16 %v402, %v401
    %v440 = vpack.c.b16 %v404, %v403
    %v441 = vpack.c.b16 %v406, %v405
    %v442 = vpack.c.b16 %v408, %v407
    %v443 = vpack.c.b16 %v410, %v409
    %v444 = vpack.c.b16 %v412, %v411
    %v445 = vpack.c.b16 %v414, %v413
    %v446 = vpack.c.b16 %v416, %v415
    %v447 = vpack.c.b16 %v418, %v417
    %v448 = vpack.c.b16 %v420, %v419
    %v449 = vpack.c.b16 %v422, %v421
    %v450 = vpack.c.b16 %v424, %v423
    %v451 = vpack.c.b16 %v426, %v425
    %v452 = vpack.c.b16 %v428, %v427
    %477 = vmatprep.subr.bf16.mxu0 0
    %478 = vmatpush1.bf16.msra.mxu0 %v436
    %479 = vmatprep.subr.bf16.mxu0 0
    %480 = vmatpush1.bf16.msra.mxu0 %v435
    %481 = vmatprep.subr.bf16.mxu0 0
    %482 = vmatpush1.bf16.msra.mxu0 %v434
    %483 = vmatprep.subr.bf16.mxu0 0
    %484 = vmatpush1.bf16.msra.mxu0 %v433
    %485 = vmatprep.subr.bf16.mxu0 0
    %486 = vmatpush1.bf16.msra.mxu0 %v432
    %487 = vmatprep.subr.bf16.mxu0 0
    %488 = vmatpush1.bf16.msra.mxu0 %v431
    %489 = vmatprep.subr.bf16.mxu0 0
    %490 = vmatpush1.bf16.msra.mxu0 %v430
    %491 = vmatprep.subr.bf16.mxu0 0
    %492 = vmatpush1.bf16.msra.mxu0 %v429
    %493 = vmatprep.subr.bf16.mxu0 0
    %494 = vmatpush2.bf16.msra.mxu0 %v444
    %495 = vmatprep.subr.bf16.mxu0 0
    %496 = vmatpush2.bf16.msra.mxu0 %v443
    %497 = vmatprep.subr.bf16.mxu0 0
    %498 = vmatpush2.bf16.msra.mxu0 %v442
    %499 = vmatprep.subr.bf16.mxu0 0
    %500 = vmatpush2.bf16.msra.mxu0 %v441
    %501 = vmatprep.subr.bf16.mxu0 0
    %502 = vmatpush2.bf16.msra.mxu0 %v440
    %503 = vmatprep.subr.bf16.mxu0 0
    %504 = vmatpush2.bf16.msra.mxu0 %v439
    %505 = vmatprep.subr.bf16.mxu0 0
    %506 = vmatpush2.bf16.msra.mxu0 %v438
    %507 = vmatprep.subr.bf16.mxu0 0
    %508 = vmatpush2.bf16.msra.mxu0 %v437
    %509 = vmatprep.mubr.bf16.mxu0 %v276
    %510 = vmatmul.mubr.bf16.gmra.mxu0 %v275
    %v511 = vpop.f32.mrf.mxu0
    %v512 = vadd.f32 %v331, %v511
    %v513 = vpop.f32.mrf.mxu0
    %v514 = vpop.f32.mrf.mxu0
    %v515 = vpop.f32.mrf.mxu0
    %516 = vdwg.mxu0
    %517 = vmatprep.subr.bf16.mxu0 0
    %518 = vmatpush1.bf16.msra.mxu0 %v452
    %519 = vmatprep.subr.bf16.mxu0 0
    %520 = vmatpush1.bf16.msra.mxu0 %v451
    %521 = vmatprep.subr.bf16.mxu0 0
    %522 = vmatpush1.bf16.msra.mxu0 %v450
    %523 = vmatprep.subr.bf16.mxu0 0
    %524 = vmatpush1.bf16.msra.mxu0 %v449
    %525 = vmatprep.subr.bf16.mxu0 0
    %526 = vmatpush1.bf16.msra.mxu0 %v448
    %527 = vmatprep.subr.bf16.mxu0 0
    %528 = vmatpush1.bf16.msra.mxu0 %v447
    %529 = vmatprep.subr.bf16.mxu0 0
    %530 = vmatpush1.bf16.msra.mxu0 %v446
    %531 = vmatprep.subr.bf16.mxu0 0
    %532 = vmatpush1.bf16.msra.mxu0 %v445
    %533 = vmatprep.subr.bf16.mxu0 0
    %534 = vmatpush2.bf16.msra.mxu0 0
    %535 = vmatprep.subr.bf16.mxu0 0
    %536 = vmatpush2.bf16.msra.mxu0 0
    %537 = vmatprep.subr.bf16.mxu0 0
    %538 = vmatpush2.bf16.msra.mxu0 0
    %539 = vmatprep.subr.bf16.mxu0 0
    %540 = vmatpush2.bf16.msra.mxu0 0
    %541 = vmatprep.subr.bf16.mxu0 0
    %542 = vmatpush2.bf16.msra.mxu0 0
    %543 = vmatprep.subr.bf16.mxu0 0
    %544 = vmatpush2.bf16.msra.mxu0 0
    %545 = vmatprep.subr.bf16.mxu0 0
    %546 = vmatpush2.bf16.msra.mxu0 0
    %547 = vmatprep.subr.bf16.mxu0 0
    %548 = vmatpush2.bf16.msra.mxu0 0
    %549 = vmatprep.mubr.bf16.mxu0 0
    %550 = vmatmul.mubr.bf16.gmra.mxu0 %v277
    %v551 = vpop.f32.mrf.mxu0
    %v552 = vadd.f32 %v512, %v551
    %v553 = vpop.f32.mrf.mxu0
    %v554 = vpop.f32.mrf.mxu0
    %v555 = vpop.f32.mrf.mxu0
    %556 = vdwg.mxu0
    %v557 = vmax.f32 %v552, 0.0
    %v558 = vpack.c.bf16 %v557, %v557
    %v559 = vld [vmem:[#allocation7] sm:$0xf]
    %v560 = vld [vmem:[#allocation7 + $0x4] sm:$0xf]
    %v561 = vld [vmem:[#allocation7 + $0x8] sm:$0xf]
    %v562 = vld [vmem:[#allocation7 + $0xc] sm:$0xf]
    %v563 = vld [vmem:[#allocation7 + $0x10] sm:$0xf]
    %v564 = vld [vmem:[#allocation7 + $0x14] sm:$0xf]
    %v565 = vld [vmem:[#allocation7 + $0x18] sm:$0xf]
    %v566 = vld [vmem:[#allocation7 + $0x1c] sm:$0xf]
    %v567 = vld [vmem:[#allocation7 + $0x20] sm:$0xf]
    %v568 = vld [vmem:[#allocation7 + $0x24] sm:$0xf]
    %v569 = vld [vmem:[#allocation7 + $0x28] sm:$0xf]
    %v570 = vld [vmem:[#allocation7 + $0x2c] sm:$0xf]
    %v571 = vld [vmem:[#allocation7 + $0x30] sm:$0xf]
    %v572 = vld [vmem:[#allocation7 + $0x34] sm:$0xf]
    %v573 = vld [vmem:[#allocation7 + $0x38] sm:$0xf]
    %v574 = vld [vmem:[#allocation7 + $0x3c] sm:$0xf]
    %v575 = vld [vmem:[#allocation5 + $0x4] sm:$0xf]
    %v576 = vld [vmem:[#allocation5 + $0x14] sm:$0xf]
    %v577 = vld [vmem:[#allocation5 + $0x24] sm:$0xf]
    %v578 = vld [vmem:[#allocation5 + $0x34] sm:$0xf]
    %v579 = vld [vmem:[#allocation5 + $0x44] sm:$0xf]
    %v580 = vld [vmem:[#allocation5 + $0x54] sm:$0xf]
    %v581 = vld [vmem:[#allocation5 + $0x64] sm:$0xf]
    %v582 = vld [vmem:[#allocation5 + $0x74] sm:$0xf]
    %v583 = vld [vmem:[#allocation5 + $0x84] sm:$0xf]
    %v584 = vld [vmem:[#allocation5 + $0x94] sm:$0xf]
    %v585 = vld [vmem:[#allocation5 + $0xa4] sm:$0xf]
    %v586 = vld [vmem:[#allocation5 + $0xb4] sm:$0xf]
    %v587 = vld [vmem:[#allocation5 + $0xc4] sm:$0xf]
    %v588 = vld [vmem:[#allocation5 + $0xd4] sm:$0xf]
    %v589 = vld [vmem:[#allocation5 + $0xe4] sm:$0xf]
    %v590 = vld [vmem:[#allocation5 + $0xf4] sm:$0xf]
    %v591 = vld [vmem:[#allocation5 + $0x104] sm:$0xf]
    %v592 = vld [vmem:[#allocation5 + $0x114] sm:$0xf]
    %v593 = vld [vmem:[#allocation5 + $0x124] sm:$0xf]
    %v594 = vld [vmem:[#allocation5 + $0x134] sm:$0xf]
    %v595 = vld [vmem:[#allocation5 + $0x144] sm:$0xf]
    %v596 = vld [vmem:[#allocation5 + $0x154] sm:$0xf]
    %v597 = vld [vmem:[#allocation5 + $0x164] sm:$0xf]
    %v598 = vld [vmem:[#allocation5 + $0x174] sm:$0xf]
    %v599 = vld [vmem:[#allocation5 + $0x184] sm:$0xf]
    %v600 = vld [vmem:[#allocation5 + $0x194] sm:$0xf]
    %v601 = vld [vmem:[#allocation5 + $0x1a4] sm:$0xf]
    %v602 = vld [vmem:[#allocation5 + $0x1b4] sm:$0xf]
    %v603 = vld [vmem:[#allocation5 + $0x1c4] sm:$0xf]
    %v604 = vld [vmem:[#allocation5 + $0x1d4] sm:$0xf]
    %v605 = vld [vmem:[#allocation5 + $0x1e4] sm:$0xf]
    %v606 = vld [vmem:[#allocation5 + $0x1f4] sm:$0xf]
    %v607 = vld [vmem:[#allocation5 + $0x204] sm:$0xf]
    %v608 = vld [vmem:[#allocation5 + $0x214] sm:$0xf]
    %v609 = vld [vmem:[#allocation5 + $0x224] sm:$0xf]
    %v610 = vld [vmem:[#allocation5 + $0x234] sm:$0xf]
    %v611 = vld [vmem:[#allocation5 + $0x244] sm:$0xf]
    %v612 = vld [vmem:[#allocation5 + $0x254] sm:$0xf]
    %v613 = vld [vmem:[#allocation5 + $0x264] sm:$0xf]
    %v614 = vld [vmem:[#allocation5 + $0x274] sm:$0xf]
    %v615 = vld [vmem:[#allocation5 + $0x284] sm:$0xf]
    %v616 = vld [vmem:[#allocation5 + $0x294] sm:$0xf]
    %v617 = vld [vmem:[#allocation5 + $0x2a4] sm:$0xf]
    %v618 = vld [vmem:[#allocation5 + $0x2b4] sm:$0xf]
    %v619 = vld [vmem:[#allocation5 + $0x2c4] sm:$0xf]
    %v620 = vld [vmem:[#allocation5 + $0x2d4] sm:$0xf]
    %v621 = vld [vmem:[#allocation5 + $0x2e4] sm:$0xf]
    %v622 = vld [vmem:[#allocation5 + $0x2f4] sm:$0xf]
    %v623 = vld [vmem:[%s4 + $0x1] sm:$0x1]
    %v625 = vlaneseq
    %v626 = vshrl.u32 %v625, 7
    %v627 = vsub.s32 0, %v626
    %v628 = vrot.slane %v623, %v627
    %v678 = vunpack.c.l.b16 %v575
    %v679 = vunpack.c.l.b16 %v576
    %v680 = vunpack.c.l.b16 %v577
    %v681 = vunpack.c.l.b16 %v578
    %v682 = vunpack.c.l.b16 %v579
    %v683 = vunpack.c.l.b16 %v580
    %v684 = vunpack.c.l.b16 %v581
    %v685 = vunpack.c.l.b16 %v582
    %v686 = vunpack.c.l.b16 %v583
    %v687 = vunpack.c.l.b16 %v584
    %v688 = vunpack.c.l.b16 %v585
    %v689 = vunpack.c.l.b16 %v586
    %v690 = vunpack.c.l.b16 %v587
    %v691 = vunpack.c.l.b16 %v588
    %v692 = vunpack.c.l.b16 %v589
    %v693 = vunpack.c.l.b16 %v590
    %v694 = vunpack.c.l.b16 %v591
    %v695 = vunpack.c.l.b16 %v592
    %v696 = vunpack.c.l.b16 %v593
    %v697 = vunpack.c.l.b16 %v594
    %v698 = vunpack.c.l.b16 %v595
    %v699 = vunpack.c.l.b16 %v596
    %v700 = vunpack.c.l.b16 %v597
    %v701 = vunpack.c.l.b16 %v598
    %v702 = vunpack.c.l.b16 %v599
    %v703 = vunpack.c.l.b16 %v600
    %v704 = vunpack.c.l.b16 %v601
    %v705 = vunpack.c.l.b16 %v602
    %v706 = vunpack.c.l.b16 %v603
    %v707 = vunpack.c.l.b16 %v604
    %v708 = vunpack.c.l.b16 %v605
    %v709 = vunpack.c.l.b16 %v606
    %v710 = vunpack.c.l.b16 %v607
    %v711 = vunpack.c.l.b16 %v608
    %v712 = vunpack.c.l.b16 %v609
    %v713 = vunpack.c.l.b16 %v610
    %v714 = vunpack.c.l.b16 %v611
    %v715 = vunpack.c.l.b16 %v612
    %v716 = vunpack.c.l.b16 %v613
    %v717 = vunpack.c.l.b16 %v614
    %v718 = vunpack.c.l.b16 %v615
    %v719 = vunpack.c.l.b16 %v616
    %v720 = vunpack.c.l.b16 %v617
    %v721 = vunpack.c.l.b16 %v618
    %v722 = vunpack.c.l.b16 %v619
    %v723 = vunpack.c.l.b16 %v620
    %v724 = vunpack.c.l.b16 %v621
    %v725 = vunpack.c.l.b16 %v622
    %v726 = vpack.c.b16 %v679, %v678
    %v727 = vpack.c.b16 %v681, %v680
    %v728 = vpack.c.b16 %v683, %v682
    %v729 = vpack.c.b16 %v685, %v684
    %v730 = vpack.c.b16 %v687, %v686
    %v731 = vpack.c.b16 %v689, %v688
    %v732 = vpack.c.b16 %v691, %v690
    %v733 = vpack.c.b16 %v693, %v692
    %v734 = vpack.c.b16 %v695, %v694
    %v735 = vpack.c.b16 %v697, %v696
    %v736 = vpack.c.b16 %v699, %v698
    %v737 = vpack.c.b16 %v701, %v700
    %v738 = vpack.c.b16 %v703, %v702
    %v739 = vpack.c.b16 %v705, %v704
    %v740 = vpack.c.b16 %v707, %v706
    %v741 = vpack.c.b16 %v709, %v708
    %v742 = vpack.c.b16 %v711, %v710
    %v743 = vpack.c.b16 %v713, %v712
    %v744 = vpack.c.b16 %v715, %v714
    %v745 = vpack.c.b16 %v717, %v716
    %v746 = vpack.c.b16 %v719, %v718
    %v747 = vpack.c.b16 %v721, %v720
    %v748 = vpack.c.b16 %v723, %v722
    %v749 = vpack.c.b16 %v725, %v724
    %774 = vmatprep.subr.bf16.mxu0 0
    %775 = vmatpush1.bf16.msra.mxu0 %v733
    %776 = vmatprep.subr.bf16.mxu0 0
    %777 = vmatpush1.bf16.msra.mxu0 %v732
    %778 = vmatprep.subr.bf16.mxu0 0
    %779 = vmatpush1.bf16.msra.mxu0 %v731
    %780 = vmatprep.subr.bf16.mxu0 0
    %781 = vmatpush1.bf16.msra.mxu0 %v730
    %782 = vmatprep.subr.bf16.mxu0 0
    %783 = vmatpush1.bf16.msra.mxu0 %v729
    %784 = vmatprep.subr.bf16.mxu0 0
    %785 = vmatpush1.bf16.msra.mxu0 %v728
    %786 = vmatprep.subr.bf16.mxu0 0
    %787 = vmatpush1.bf16.msra.mxu0 %v727
    %788 = vmatprep.subr.bf16.mxu0 0
    %789 = vmatpush1.bf16.msra.mxu0 %v726
    %790 = vmatprep.subr.bf16.mxu0 0
    %791 = vmatpush2.bf16.msra.mxu0 %v741
    %792 = vmatprep.subr.bf16.mxu0 0
    %793 = vmatpush2.bf16.msra.mxu0 %v740
    %794 = vmatprep.subr.bf16.mxu0 0
    %795 = vmatpush2.bf16.msra.mxu0 %v739
    %796 = vmatprep.subr.bf16.mxu0 0
    %797 = vmatpush2.bf16.msra.mxu0 %v738
    %798 = vmatprep.subr.bf16.mxu0 0
    %799 = vmatpush2.bf16.msra.mxu0 %v737
    %800 = vmatprep.subr.bf16.mxu0 0
    %801 = vmatpush2.bf16.msra.mxu0 %v736
    %802 = vmatprep.subr.bf16.mxu0 0
    %803 = vmatpush2.bf16.msra.mxu0 %v735
    %804 = vmatprep.subr.bf16.mxu0 0
    %805 = vmatpush2.bf16.msra.mxu0 %v734
    %806 = vmatprep.mubr.bf16.mxu0 %v276
    %807 = vmatmul.mubr.bf16.gmra.mxu0 %v275
    %v808 = vpop.f32.mrf.mxu0
    %v809 = vadd.f32 %v628, %v808
    %v810 = vpop.f32.mrf.mxu0
    %v811 = vpop.f32.mrf.mxu0
    %v812 = vpop.f32.mrf.mxu0
    %813 = vdwg.mxu0
    %814 = vmatprep.subr.bf16.mxu0 0
    %815 = vmatpush1.bf16.msra.mxu0 %v749
    %816 = vmatprep.subr.bf16.mxu0 0
    %817 = vmatpush1.bf16.msra.mxu0 %v748
    %818 = vmatprep.subr.bf16.mxu0 0
    %819 = vmatpush1.bf16.msra.mxu0 %v747
    %820 = vmatprep.subr.bf16.mxu0 0
    %821 = vmatpush1.bf16.msra.mxu0 %v746
    %822 = vmatprep.subr.bf16.mxu0 0
    %823 = vmatpush1.bf16.msra.mxu0 %v745
    %824 = vmatprep.subr.bf16.mxu0 0
    %825 = vmatpush1.bf16.msra.mxu0 %v744
    %826 = vmatprep.subr.bf16.mxu0 0
    %827 = vmatpush1.bf16.msra.mxu0 %v743
    %828 = vmatprep.subr.bf16.mxu0 0
    %829 = vmatpush1.bf16.msra.mxu0 %v742
    %830 = vmatprep.subr.bf16.mxu0 0
    %831 = vmatpush2.bf16.msra.mxu0 0
    %832 = vmatprep.subr.bf16.mxu0 0
    %833 = vmatpush2.bf16.msra.mxu0 0
    %834 = vmatprep.subr.bf16.mxu0 0
    %835 = vmatpush2.bf16.msra.mxu0 0
    %836 = vmatprep.subr.bf16.mxu0 0
    %837 = vmatpush2.bf16.msra.mxu0 0
    %838 = vmatprep.subr.bf16.mxu0 0
    %839 = vmatpush2.bf16.msra.mxu0 0
    %840 = vmatprep.subr.bf16.mxu0 0
    %841 = vmatpush2.bf16.msra.mxu0 0
    %842 = vmatprep.subr.bf16.mxu0 0
    %843 = vmatpush2.bf16.msra.mxu0 0
    %844 = vmatprep.subr.bf16.mxu0 0
    %845 = vmatpush2.bf16.msra.mxu0 0
    %846 = vmatprep.mubr.bf16.mxu0 0
    %847 = vmatmul.mubr.bf16.gmra.mxu0 %v277
    %v848 = vpop.f32.mrf.mxu0
    %v849 = vadd.f32 %v809, %v848
    %v850 = vpop.f32.mrf.mxu0
    %v851 = vpop.f32.mrf.mxu0
    %v852 = vpop.f32.mrf.mxu0
    %853 = vdwg.mxu0
    %v854 = vmax.f32 %v849, 0.0
    %v855 = vpack.c.bf16 %v854, %v854
    %v856 = vld [vmem:[#allocation7 + $0x40] sm:$0xf]
    %v857 = vld [vmem:[#allocation7 + $0x44] sm:$0xf]
    %v858 = vld [vmem:[#allocation7 + $0x48] sm:$0xf]
    %v859 = vld [vmem:[#allocation7 + $0x4c] sm:$0xf]
    %v860 = vld [vmem:[#allocation7 + $0x50] sm:$0xf]
    %v861 = vld [vmem:[#allocation7 + $0x54] sm:$0xf]
    %v862 = vld [vmem:[#allocation7 + $0x58] sm:$0xf]
    %v863 = vld [vmem:[#allocation7 + $0x5c] sm:$0xf]
    %v864 = vld [vmem:[#allocation7 + $0x60] sm:$0xf]
    %v865 = vld [vmem:[#allocation7 + $0x64] sm:$0xf]
    %v866 = vld [vmem:[#allocation7 + $0x68] sm:$0xf]
    %v867 = vld [vmem:[#allocation7 + $0x6c] sm:$0xf]
    %v868 = vld [vmem:[#allocation7 + $0x70] sm:$0xf]
    %v869 = vld [vmem:[#allocation7 + $0x74] sm:$0xf]
    %v870 = vld [vmem:[#allocation7 + $0x78] sm:$0xf]
    %v871 = vld [vmem:[#allocation7 + $0x7c] sm:$0xf]
    %v888 = vunpack.c.l.b16 %v856
    %v889 = vunpack.c.l.b16 %v857
    %v890 = vunpack.c.l.b16 %v858
    %v891 = vunpack.c.l.b16 %v859
    %v892 = vunpack.c.l.b16 %v860
    %v893 = vunpack.c.l.b16 %v861
    %v894 = vunpack.c.l.b16 %v862
    %v895 = vunpack.c.l.b16 %v863
    %v896 = vunpack.c.l.b16 %v864
    %v897 = vunpack.c.l.b16 %v865
    %v898 = vunpack.c.l.b16 %v866
    %v899 = vunpack.c.l.b16 %v867
    %v900 = vunpack.c.l.b16 %v868
    %v901 = vunpack.c.l.b16 %v869
    %v902 = vunpack.c.l.b16 %v870
    %v903 = vunpack.c.l.b16 %v871
    %v904 = vpack.c.b16 %v889, %v888
    %v905 = vpack.c.b16 %v891, %v890
    %v906 = vpack.c.b16 %v893, %v892
    %v907 = vpack.c.b16 %v895, %v894
    %v908 = vpack.c.b16 %v897, %v896
    %v909 = vpack.c.b16 %v899, %v898
    %v910 = vpack.c.b16 %v901, %v900
    %v911 = vpack.c.b16 %v903, %v902
    %920 = vmatprep.subr.bf16.mxu0 0
    %921 = vmatpush1.bf16.msra.mxu0 %v911
    %922 = vmatprep.subr.bf16.mxu0 0
    %923 = vmatpush1.bf16.msra.mxu0 %v910
    %924 = vmatprep.subr.bf16.mxu0 0
    %925 = vmatpush1.bf16.msra.mxu0 %v909
    %926 = vmatprep.subr.bf16.mxu0 0
    %927 = vmatpush1.bf16.msra.mxu0 %v908
    %928 = vmatprep.subr.bf16.mxu0 0
    %929 = vmatpush1.bf16.msra.mxu0 %v907
    %930 = vmatprep.subr.bf16.mxu0 0
    %931 = vmatpush1.bf16.msra.mxu0 %v906
    %932 = vmatprep.subr.bf16.mxu0 0
    %933 = vmatpush1.bf16.msra.mxu0 %v905
    %934 = vmatprep.subr.bf16.mxu0 0
    %935 = vmatpush1.bf16.msra.mxu0 %v904
    %936 = vmatprep.subr.bf16.mxu0 0
    %937 = vmatpush2.bf16.msra.mxu0 0
    %938 = vmatprep.subr.bf16.mxu0 0
    %939 = vmatpush2.bf16.msra.mxu0 0
    %940 = vmatprep.subr.bf16.mxu0 0
    %941 = vmatpush2.bf16.msra.mxu0 0
    %942 = vmatprep.subr.bf16.mxu0 0
    %943 = vmatpush2.bf16.msra.mxu0 0
    %944 = vmatprep.subr.bf16.mxu0 0
    %945 = vmatpush2.bf16.msra.mxu0 0
    %946 = vmatprep.subr.bf16.mxu0 0
    %947 = vmatpush2.bf16.msra.mxu0 0
    %948 = vmatprep.subr.bf16.mxu0 0
    %949 = vmatpush2.bf16.msra.mxu0 0
    %950 = vmatprep.subr.bf16.mxu0 0
    %951 = vmatpush2.bf16.msra.mxu0 0
    %952 = vmatprep.mubr.bf16.mxu0 0
    %953 = vmatmul.mubr.bf16.gmra.mxu0 %v855
    %v954 = vpop.f32.mrf.mxu0
    %v955 = vadd.f32 0.0, %v954
    %v956 = vpop.f32.mrf.mxu0
    %v957 = vpop.f32.mrf.mxu0
    %v958 = vpop.f32.mrf.mxu0
    %959 = vdwg.mxu0
    %v976 = vunpack.c.l.b16 %v559
    %v977 = vunpack.c.l.b16 %v560
    %v978 = vunpack.c.l.b16 %v561
    %v979 = vunpack.c.l.b16 %v562
    %v980 = vunpack.c.l.b16 %v563
    %v981 = vunpack.c.l.b16 %v564
    %v982 = vunpack.c.l.b16 %v565
    %v983 = vunpack.c.l.b16 %v566
    %v984 = vunpack.c.l.b16 %v567
    %v985 = vunpack.c.l.b16 %v568
    %v986 = vunpack.c.l.b16 %v569
    %v987 = vunpack.c.l.b16 %v570
    %v988 = vunpack.c.l.b16 %v571
    %v989 = vunpack.c.l.b16 %v572
    %v990 = vunpack.c.l.b16 %v573
    %v991 = vunpack.c.l.b16 %v574
    %v992 = vpack.c.b16 %v977, %v976
    %v993 = vpack.c.b16 %v979, %v978
    %v994 = vpack.c.b16 %v981, %v980
    %v995 = vpack.c.b16 %v983, %v982
    %v996 = vpack.c.b16 %v985, %v984
    %v997 = vpack.c.b16 %v987, %v986
    %v998 = vpack.c.b16 %v989, %v988
    %v999 = vpack.c.b16 %v991, %v990
    %1008 = vmatprep.subr.bf16.mxu0 0
    %1009 = vmatpush1.bf16.msra.mxu0 %v999
    %1010 = vmatprep.subr.bf16.mxu0 0
    %1011 = vmatpush1.bf16.msra.mxu0 %v998
    %1012 = vmatprep.subr.bf16.mxu0 0
    %1013 = vmatpush1.bf16.msra.mxu0 %v997
    %1014 = vmatprep.subr.bf16.mxu0 0
    %1015 = vmatpush1.bf16.msra.mxu0 %v996
    %1016 = vmatprep.subr.bf16.mxu0 0
    %1017 = vmatpush1.bf16.msra.mxu0 %v995
    %1018 = vmatprep.subr.bf16.mxu0 0
    %1019 = vmatpush1.bf16.msra.mxu0 %v994
    %1020 = vmatprep.subr.bf16.mxu0 0
    %1021 = vmatpush1.bf16.msra.mxu0 %v993
    %1022 = vmatprep.subr.bf16.mxu0 0
    %1023 = vmatpush1.bf16.msra.mxu0 %v992
    %1024 = vmatprep.subr.bf16.mxu0 0
    %1025 = vmatpush2.bf16.msra.mxu0 0
    %1026 = vmatprep.subr.bf16.mxu0 0
    %1027 = vmatpush2.bf16.msra.mxu0 0
    %1028 = vmatprep.subr.bf16.mxu0 0
    %1029 = vmatpush2.bf16.msra.mxu0 0
    %1030 = vmatprep.subr.bf16.mxu0 0
    %1031 = vmatpush2.bf16.msra.mxu0 0
    %1032 = vmatprep.subr.bf16.mxu0 0
    %1033 = vmatpush2.bf16.msra.mxu0 0
    %1034 = vmatprep.subr.bf16.mxu0 0
    %1035 = vmatpush2.bf16.msra.mxu0 0
    %1036 = vmatprep.subr.bf16.mxu0 0
    %1037 = vmatpush2.bf16.msra.mxu0 0
    %1038 = vmatprep.subr.bf16.mxu0 0
    %1039 = vmatpush2.bf16.msra.mxu0 0
    %1040 = vmatprep.mubr.bf16.mxu0 0
    %1041 = vmatmul.mubr.bf16.gmra.mxu0 %v558
    %v1042 = vpop.f32.mrf.mxu0
    %v1043 = vadd.f32 %v955, %v1042
    %v1044 = vpop.f32.mrf.mxu0
    %v1045 = vpop.f32.mrf.mxu0
    %v1046 = vpop.f32.mrf.mxu0
    %1047 = vdwg.mxu0
    %v1048 = vld [vmem:[#allocation5 + $0x8] sm:$0xf]
    %v1049 = vld [vmem:[#allocation5 + $0x18] sm:$0xf]
    %v1050 = vld [vmem:[#allocation5 + $0x28] sm:$0xf]
    %v1051 = vld [vmem:[#allocation5 + $0x38] sm:$0xf]
    %v1052 = vld [vmem:[#allocation5 + $0x48] sm:$0xf]
    %v1053 = vld [vmem:[#allocation5 + $0x58] sm:$0xf]
    %v1054 = vld [vmem:[#allocation5 + $0x68] sm:$0xf]
    %v1055 = vld [vmem:[#allocation5 + $0x78] sm:$0xf]
    %v1056 = vld [vmem:[#allocation5 + $0x88] sm:$0xf]
    %v1057 = vld [vmem:[#allocation5 + $0x98] sm:$0xf]
    %v1058 = vld [vmem:[#allocation5 + $0xa8] sm:$0xf]
    %v1059 = vld [vmem:[#allocation5 + $0xb8] sm:$0xf]
    %v1060 = vld [vmem:[#allocation5 + $0xc8] sm:$0xf]
    %v1061 = vld [vmem:[#allocation5 + $0xd8] sm:$0xf]
    %v1062 = vld [vmem:[#allocation5 + $0xe8] sm:$0xf]
    %v1063 = vld [vmem:[#allocation5 + $0xf8] sm:$0xf]
    %v1064 = vld [vmem:[#allocation5 + $0x108] sm:$0xf]
    %v1065 = vld [vmem:[#allocation5 + $0x118] sm:$0xf]
    %v1066 = vld [vmem:[#allocation5 + $0x128] sm:$0xf]
    %v1067 = vld [vmem:[#allocation5 + $0x138] sm:$0xf]
    %v1068 = vld [vmem:[#allocation5 + $0x148] sm:$0xf]
    %v1069 = vld [vmem:[#allocation5 + $0x158] sm:$0xf]
    %v1070 = vld [vmem:[#allocation5 + $0x168] sm:$0xf]
    %v1071 = vld [vmem:[#allocation5 + $0x178] sm:$0xf]
    %v1072 = vld [vmem:[#allocation5 + $0x188] sm:$0xf]
    %v1073 = vld [vmem:[#allocation5 + $0x198] sm:$0xf]
    %v1074 = vld [vmem:[#allocation5 + $0x1a8] sm:$0xf]
    %v1075 = vld [vmem:[#allocation5 + $0x1b8] sm:$0xf]
    %v1076 = vld [vmem:[#allocation5 + $0x1c8] sm:$0xf]
    %v1077 = vld [vmem:[#allocation5 + $0x1d8] sm:$0xf]
    %v1078 = vld [vmem:[#allocation5 + $0x1e8] sm:$0xf]
    %v1079 = vld [vmem:[#allocation5 + $0x1f8] sm:$0xf]
    %v1080 = vld [vmem:[#allocation5 + $0x208] sm:$0xf]
    %v1081 = vld [vmem:[#allocation5 + $0x218] sm:$0xf]
    %v1082 = vld [vmem:[#allocation5 + $0x228] sm:$0xf]
    %v1083 = vld [vmem:[#allocation5 + $0x238] sm:$0xf]
    %v1084 = vld [vmem:[#allocation5 + $0x248] sm:$0xf]
    %v1085 = vld [vmem:[#allocation5 + $0x258] sm:$0xf]
    %v1086 = vld [vmem:[#allocation5 + $0x268] sm:$0xf]
    %v1087 = vld [vmem:[#allocation5 + $0x278] sm:$0xf]
    %v1088 = vld [vmem:[#allocation5 + $0x288] sm:$0xf]
    %v1089 = vld [vmem:[#allocation5 + $0x298] sm:$0xf]
    %v1090 = vld [vmem:[#allocation5 + $0x2a8] sm:$0xf]
    %v1091 = vld [vmem:[#allocation5 + $0x2b8] sm:$0xf]
    %v1092 = vld [vmem:[#allocation5 + $0x2c8] sm:$0xf]
    %v1093 = vld [vmem:[#allocation5 + $0x2d8] sm:$0xf]
    %v1094 = vld [vmem:[#allocation5 + $0x2e8] sm:$0xf]
    %v1095 = vld [vmem:[#allocation5 + $0x2f8] sm:$0xf]
    %v1096 = vld [vmem:[%s4 + $0x2] sm:$0x1]
    %v1098 = vlaneseq
    %v1099 = vshrl.u32 %v1098, 7
    %v1100 = vsub.s32 0, %v1099
    %v1101 = vrot.slane %v1096, %v1100
    %v1151 = vunpack.c.l.b16 %v1048
    %v1152 = vunpack.c.l.b16 %v1049
    %v1153 = vunpack.c.l.b16 %v1050
    %v1154 = vunpack.c.l.b16 %v1051
    %v1155 = vunpack.c.l.b16 %v1052
    %v1156 = vunpack.c.l.b16 %v1053
    %v1157 = vunpack.c.l.b16 %v1054
    %v1158 = vunpack.c.l.b16 %v1055
    %v1159 = vunpack.c.l.b16 %v1056
    %v1160 = vunpack.c.l.b16 %v1057
    %v1161 = vunpack.c.l.b16 %v1058
    %v1162 = vunpack.c.l.b16 %v1059
    %v1163 = vunpack.c.l.b16 %v1060
    %v1164 = vunpack.c.l.b16 %v1061
    %v1165 = vunpack.c.l.b16 %v1062
    %v1166 = vunpack.c.l.b16 %v1063
    %v1167 = vunpack.c.l.b16 %v1064
    %v1168 = vunpack.c.l.b16 %v1065
    %v1169 = vunpack.c.l.b16 %v1066
    %v1170 = vunpack.c.l.b16 %v1067
    %v1171 = vunpack.c.l.b16 %v1068
    %v1172 = vunpack.c.l.b16 %v1069
    %v1173 = vunpack.c.l.b16 %v1070
    %v1174 = vunpack.c.l.b16 %v1071
    %v1175 = vunpack.c.l.b16 %v1072
    %v1176 = vunpack.c.l.b16 %v1073
    %v1177 = vunpack.c.l.b16 %v1074
    %v1178 = vunpack.c.l.b16 %v1075
    %v1179 = vunpack.c.l.b16 %v1076
    %v1180 = vunpack.c.l.b16 %v1077
    %v1181 = vunpack.c.l.b16 %v1078
    %v1182 = vunpack.c.l.b16 %v1079
    %v1183 = vunpack.c.l.b16 %v1080
    %v1184 = vunpack.c.l.b16 %v1081
    %v1185 = vunpack.c.l.b16 %v1082
    %v1186 = vunpack.c.l.b16 %v1083
    %v1187 = vunpack.c.l.b16 %v1084
    %v1188 = vunpack.c.l.b16 %v1085
    %v1189 = vunpack.c.l.b16 %v1086
    %v1190 = vunpack.c.l.b16 %v1087
    %v1191 = vunpack.c.l.b16 %v1088
    %v1192 = vunpack.c.l.b16 %v1089
    %v1193 = vunpack.c.l.b16 %v1090
    %v1194 = vunpack.c.l.b16 %v1091
    %v1195 = vunpack.c.l.b16 %v1092
    %v1196 = vunpack.c.l.b16 %v1093
    %v1197 = vunpack.c.l.b16 %v1094
    %v1198 = vunpack.c.l.b16 %v1095
    %v1199 = vpack.c.b16 %v1152, %v1151
    %v1200 = vpack.c.b16 %v1154, %v1153
    %v1201 = vpack.c.b16 %v1156, %v1155
    %v1202 = vpack.c.b16 %v1158, %v1157
    %v1203 = vpack.c.b16 %v1160, %v1159
    %v1204 = vpack.c.b16 %v1162, %v1161
    %v1205 = vpack.c.b16 %v1164, %v1163
    %v1206 = vpack.c.b16 %v1166, %v1165
    %v1207 = vpack.c.b16 %v1168, %v1167
    %v1208 = vpack.c.b16 %v1170, %v1169
    %v1209 = vpack.c.b16 %v1172, %v1171
    %v1210 = vpack.c.b16 %v1174, %v1173
    %v1211 = vpack.c.b16 %v1176, %v1175
    %v1212 = vpack.c.b16 %v1178, %v1177
    %v1213 = vpack.c.b16 %v1180, %v1179
    %v1214 = vpack.c.b16 %v1182, %v1181
    %v1215 = vpack.c.b16 %v1184, %v1183
    %v1216 = vpack.c.b16 %v1186, %v1185
    %v1217 = vpack.c.b16 %v1188, %v1187
    %v1218 = vpack.c.b16 %v1190, %v1189
    %v1219 = vpack.c.b16 %v1192, %v1191
    %v1220 = vpack.c.b16 %v1194, %v1193
    %v1221 = vpack.c.b16 %v1196, %v1195
    %v1222 = vpack.c.b16 %v1198, %v1197
    %1247 = vmatprep.subr.bf16.mxu0 0
    %1248 = vmatpush1.bf16.msra.mxu0 %v1206
    %1249 = vmatprep.subr.bf16.mxu0 0
    %1250 = vmatpush1.bf16.msra.mxu0 %v1205
    %1251 = vmatprep.subr.bf16.mxu0 0
    %1252 = vmatpush1.bf16.msra.mxu0 %v1204
    %1253 = vmatprep.subr.bf16.mxu0 0
    %1254 = vmatpush1.bf16.msra.mxu0 %v1203
    %1255 = vmatprep.subr.bf16.mxu0 0
    %1256 = vmatpush1.bf16.msra.mxu0 %v1202
    %1257 = vmatprep.subr.bf16.mxu0 0
    %1258 = vmatpush1.bf16.msra.mxu0 %v1201
    %1259 = vmatprep.subr.bf16.mxu0 0
    %1260 = vmatpush1.bf16.msra.mxu0 %v1200
    %1261 = vmatprep.subr.bf16.mxu0 0
    %1262 = vmatpush1.bf16.msra.mxu0 %v1199
    %1263 = vmatprep.subr.bf16.mxu0 0
    %1264 = vmatpush2.bf16.msra.mxu0 %v1214
    %1265 = vmatprep.subr.bf16.mxu0 0
    %1266 = vmatpush2.bf16.msra.mxu0 %v1213
    %1267 = vmatprep.subr.bf16.mxu0 0
    %1268 = vmatpush2.bf16.msra.mxu0 %v1212
    %1269 = vmatprep.subr.bf16.mxu0 0
    %1270 = vmatpush2.bf16.msra.mxu0 %v1211
    %1271 = vmatprep.subr.bf16.mxu0 0
    %1272 = vmatpush2.bf16.msra.mxu0 %v1210
    %1273 = vmatprep.subr.bf16.mxu0 0
    %1274 = vmatpush2.bf16.msra.mxu0 %v1209
    %1275 = vmatprep.subr.bf16.mxu0 0
    %1276 = vmatpush2.bf16.msra.mxu0 %v1208
    %1277 = vmatprep.subr.bf16.mxu0 0
    %1278 = vmatpush2.bf16.msra.mxu0 %v1207
    %1279 = vmatprep.mubr.bf16.mxu0 %v276
    %1280 = vmatmul.mubr.bf16.gmra.mxu0 %v275
    %v1281 = vpop.f32.mrf.mxu0
    %v1282 = vadd.f32 %v1101, %v1281
    %v1283 = vpop.f32.mrf.mxu0
    %v1284 = vpop.f32.mrf.mxu0
    %v1285 = vpop.f32.mrf.mxu0
    %1286 = vdwg.mxu0
    %1287 = vmatprep.subr.bf16.mxu0 0
    %1288 = vmatpush1.bf16.msra.mxu0 %v1222
    %1289 = vmatprep.subr.bf16.mxu0 0
    %1290 = vmatpush1.bf16.msra.mxu0 %v1221
    %1291 = vmatprep.subr.bf16.mxu0 0
    %1292 = vmatpush1.bf16.msra.mxu0 %v1220
    %1293 = vmatprep.subr.bf16.mxu0 0
    %1294 = vmatpush1.bf16.msra.mxu0 %v1219
    %1295 = vmatprep.subr.bf16.mxu0 0
    %1296 = vmatpush1.bf16.msra.mxu0 %v1218
    %1297 = vmatprep.subr.bf16.mxu0 0
    %1298 = vmatpush1.bf16.msra.mxu0 %v1217
    %1299 = vmatprep.subr.bf16.mxu0 0
    %1300 = vmatpush1.bf16.msra.mxu0 %v1216
    %1301 = vmatprep.subr.bf16.mxu0 0
    %1302 = vmatpush1.bf16.msra.mxu0 %v1215
    %1303 = vmatprep.subr.bf16.mxu0 0
    %1304 = vmatpush2.bf16.msra.mxu0 0
    %1305 = vmatprep.subr.bf16.mxu0 0
    %1306 = vmatpush2.bf16.msra.mxu0 0
    %1307 = vmatprep.subr.bf16.mxu0 0
    %1308 = vmatpush2.bf16.msra.mxu0 0
    %1309 = vmatprep.subr.bf16.mxu0 0
    %1310 = vmatpush2.bf16.msra.mxu0 0
    %1311 = vmatprep.subr.bf16.mxu0 0
    %1312 = vmatpush2.bf16.msra.mxu0 0
    %1313 = vmatprep.subr.bf16.mxu0 0
    %1314 = vmatpush2.bf16.msra.mxu0 0
    %1315 = vmatprep.subr.bf16.mxu0 0
    %1316 = vmatpush2.bf16.msra.mxu0 0
    %1317 = vmatprep.subr.bf16.mxu0 0
    %1318 = vmatpush2.bf16.msra.mxu0 0
    %1319 = vmatprep.mubr.bf16.mxu0 0
    %1320 = vmatmul.mubr.bf16.gmra.mxu0 %v277
    %v1321 = vpop.f32.mrf.mxu0
    %v1322 = vadd.f32 %v1282, %v1321
    %v1323 = vpop.f32.mrf.mxu0
    %v1324 = vpop.f32.mrf.mxu0
    %v1325 = vpop.f32.mrf.mxu0
    %1326 = vdwg.mxu0
    %v1327 = vmax.f32 %v1322, 0.0
    %v1328 = vpack.c.bf16 %v1327, %v1327
    %v1329 = vld [vmem:[#allocation7 + $0x80] sm:$0xf]
    %v1330 = vld [vmem:[#allocation7 + $0x84] sm:$0xf]
    %v1331 = vld [vmem:[#allocation7 + $0x88] sm:$0xf]
    %v1332 = vld [vmem:[#allocation7 + $0x8c] sm:$0xf]
    %v1333 = vld [vmem:[#allocation7 + $0x90] sm:$0xf]
    %v1334 = vld [vmem:[#allocation7 + $0x94] sm:$0xf]
    %v1335 = vld [vmem:[#allocation7 + $0x98] sm:$0xf]
    %v1336 = vld [vmem:[#allocation7 + $0x9c] sm:$0xf]
    %v1337 = vld [vmem:[#allocation7 + $0xa0] sm:$0xf]
    %v1338 = vld [vmem:[#allocation7 + $0xa4] sm:$0xf]
    %v1339 = vld [vmem:[#allocation7 + $0xa8] sm:$0xf]
    %v1340 = vld [vmem:[#allocation7 + $0xac] sm:$0xf]
    %v1341 = vld [vmem:[#allocation7 + $0xb0] sm:$0xf]
    %v1342 = vld [vmem:[#allocation7 + $0xb4] sm:$0xf]
    %v1343 = vld [vmem:[#allocation7 + $0xb8] sm:$0xf]
    %v1344 = vld [vmem:[#allocation7 + $0xbc] sm:$0xf]
    %v1361 = vunpack.c.l.b16 %v1329
    %v1362 = vunpack.c.l.b16 %v1330
    %v1363 = vunpack.c.l.b16 %v1331
    %v1364 = vunpack.c.l.b16 %v1332
    %v1365 = vunpack.c.l.b16 %v1333
    %v1366 = vunpack.c.l.b16 %v1334
    %v1367 = vunpack.c.l.b16 %v1335
    %v1368 = vunpack.c.l.b16 %v1336
    %v1369 = vunpack.c.l.b16 %v1337
    %v1370 = vunpack.c.l.b16 %v1338
    %v1371 = vunpack.c.l.b16 %v1339
    %v1372 = vunpack.c.l.b16 %v1340
    %v1373 = vunpack.c.l.b16 %v1341
    %v1374 = vunpack.c.l.b16 %v1342
    %v1375 = vunpack.c.l.b16 %v1343
    %v1376 = vunpack.c.l.b16 %v1344
    %v1377 = vpack.c.b16 %v1362, %v1361
    %v1378 = vpack.c.b16 %v1364, %v1363
    %v1379 = vpack.c.b16 %v1366, %v1365
    %v1380 = vpack.c.b16 %v1368, %v1367
    %v1381 = vpack.c.b16 %v1370, %v1369
    %v1382 = vpack.c.b16 %v1372, %v1371
    %v1383 = vpack.c.b16 %v1374, %v1373
    %v1384 = vpack.c.b16 %v1376, %v1375
    %1393 = vmatprep.subr.bf16.mxu0 0
    %1394 = vmatpush1.bf16.msra.mxu0 %v1384
    %1395 = vmatprep.subr.bf16.mxu0 0
    %1396 = vmatpush1.bf16.msra.mxu0 %v1383
    %1397 = vmatprep.subr.bf16.mxu0 0
    %1398 = vmatpush1.bf16.msra.mxu0 %v1382
    %1399 = vmatprep.subr.bf16.mxu0 0
    %1400 = vmatpush1.bf16.msra.mxu0 %v1381
    %1401 = vmatprep.subr.bf16.mxu0 0
    %1402 = vmatpush1.bf16.msra.mxu0 %v1380
    %1403 = vmatprep.subr.bf16.mxu0 0
    %1404 = vmatpush1.bf16.msra.mxu0 %v1379
    %1405 = vmatprep.subr.bf16.mxu0 0
    %1406 = vmatpush1.bf16.msra.mxu0 %v1378
    %1407 = vmatprep.subr.bf16.mxu0 0
    %1408 = vmatpush1.bf16.msra.mxu0 %v1377
    %1409 = vmatprep.subr.bf16.mxu0 0
    %1410 = vmatpush2.bf16.msra.mxu0 0
    %1411 = vmatprep.subr.bf16.mxu0 0
    %1412 = vmatpush2.bf16.msra.mxu0 0
    %1413 = vmatprep.subr.bf16.mxu0 0
    %1414 = vmatpush2.bf16.msra.mxu0 0
    %1415 = vmatprep.subr.bf16.mxu0 0
    %1416 = vmatpush2.bf16.msra.mxu0 0
    %1417 = vmatprep.subr.bf16.mxu0 0
    %1418 = vmatpush2.bf16.msra.mxu0 0
    %1419 = vmatprep.subr.bf16.mxu0 0
    %1420 = vmatpush2.bf16.msra.mxu0 0
    %1421 = vmatprep.subr.bf16.mxu0 0
    %1422 = vmatpush2.bf16.msra.mxu0 0
    %1423 = vmatprep.subr.bf16.mxu0 0
    %1424 = vmatpush2.bf16.msra.mxu0 0
    %1425 = vmatprep.mubr.bf16.mxu0 0
    %1426 = vmatmul.mubr.bf16.gmra.mxu0 %v1328
    %v1427 = vpop.f32.mrf.mxu0
    %v1428 = vadd.f32 0.0, %v1427
    %v1429 = vpop.f32.mrf.mxu0
    %v1430 = vpop.f32.mrf.mxu0
    %v1431 = vpop.f32.mrf.mxu0
    %1432 = vdwg.mxu0
    %v1433 = vadd.f32 %v1043, %v1428
    %v1434 = vld [vmem:[#allocation5 + $0xc] sm:$0xf]
    %v1435 = vld [vmem:[#allocation5 + $0x1c] sm:$0xf]
    %v1436 = vld [vmem:[#allocation5 + $0x2c] sm:$0xf]
    %v1437 = vld [vmem:[#allocation5 + $0x3c] sm:$0xf]
    %v1438 = vld [vmem:[#allocation5 + $0x4c] sm:$0xf]
    %v1439 = vld [vmem:[#allocation5 + $0x5c] sm:$0xf]
    %v1440 = vld [vmem:[#allocation5 + $0x6c] sm:$0xf]
    %v1441 = vld [vmem:[#allocation5 + $0x7c] sm:$0xf]
    %v1442 = vld [vmem:[#allocation5 + $0x8c] sm:$0xf]
    %v1443 = vld [vmem:[#allocation5 + $0x9c] sm:$0xf]
    %v1444 = vld [vmem:[#allocation5 + $0xac] sm:$0xf]
    %v1445 = vld [vmem:[#allocation5 + $0xbc] sm:$0xf]
    %v1446 = vld [vmem:[#allocation5 + $0xcc] sm:$0xf]
    %v1447 = vld [vmem:[#allocation5 + $0xdc] sm:$0xf]
    %v1448 = vld [vmem:[#allocation5 + $0xec] sm:$0xf]
    %v1449 = vld [vmem:[#allocation5 + $0xfc] sm:$0xf]
    %v1450 = vld [vmem:[#allocation5 + $0x10c] sm:$0xf]
    %v1451 = vld [vmem:[#allocation5 + $0x11c] sm:$0xf]
    %v1452 = vld [vmem:[#allocation5 + $0x12c] sm:$0xf]
    %v1453 = vld [vmem:[#allocation5 + $0x13c] sm:$0xf]
    %v1454 = vld [vmem:[#allocation5 + $0x14c] sm:$0xf]
    %v1455 = vld [vmem:[#allocation5 + $0x15c] sm:$0xf]
    %v1456 = vld [vmem:[#allocation5 + $0x16c] sm:$0xf]
    %v1457 = vld [vmem:[#allocation5 + $0x17c] sm:$0xf]
    %v1458 = vld [vmem:[#allocation5 + $0x18c] sm:$0xf]
    %v1459 = vld [vmem:[#allocation5 + $0x19c] sm:$0xf]
    %v1460 = vld [vmem:[#allocation5 + $0x1ac] sm:$0xf]
    %v1461 = vld [vmem:[#allocation5 + $0x1bc] sm:$0xf]
    %v1462 = vld [vmem:[#allocation5 + $0x1cc] sm:$0xf]
    %v1463 = vld [vmem:[#allocation5 + $0x1dc] sm:$0xf]
    %v1464 = vld [vmem:[#allocation5 + $0x1ec] sm:$0xf]
    %v1465 = vld [vmem:[#allocation5 + $0x1fc] sm:$0xf]
    %v1466 = vld [vmem:[#allocation5 + $0x20c] sm:$0xf]
    %v1467 = vld [vmem:[#allocation5 + $0x21c] sm:$0xf]
    %v1468 = vld [vmem:[#allocation5 + $0x22c] sm:$0xf]
    %v1469 = vld [vmem:[#allocation5 + $0x23c] sm:$0xf]
    %v1470 = vld [vmem:[#allocation5 + $0x24c] sm:$0xf]
    %v1471 = vld [vmem:[#allocation5 + $0x25c] sm:$0xf]
    %v1472 = vld [vmem:[#allocation5 + $0x26c] sm:$0xf]
    %v1473 = vld [vmem:[#allocation5 + $0x27c] sm:$0xf]
    %v1474 = vld [vmem:[#allocation5 + $0x28c] sm:$0xf]
    %v1475 = vld [vmem:[#allocation5 + $0x29c] sm:$0xf]
    %v1476 = vld [vmem:[#allocation5 + $0x2ac] sm:$0xf]
    %v1477 = vld [vmem:[#allocation5 + $0x2bc] sm:$0xf]
    %v1478 = vld [vmem:[#allocation5 + $0x2cc] sm:$0xf]
    %v1479 = vld [vmem:[#allocation5 + $0x2dc] sm:$0xf]
    %v1480 = vld [vmem:[#allocation5 + $0x2ec] sm:$0xf]
    %v1481 = vld [vmem:[#allocation5 + $0x2fc] sm:$0xf]
    %v1482 = vld [vmem:[%s4 + $0x3] sm:$0x1]
    %v1484 = vlaneseq
    %v1485 = vshrl.u32 %v1484, 7
    %v1486 = vsub.s32 0, %v1485
    %v1487 = vrot.slane %v1482, %v1486
    %v1537 = vunpack.c.l.b16 %v1434
    %v1538 = vunpack.c.l.b16 %v1435
    %v1539 = vunpack.c.l.b16 %v1436
    %v1540 = vunpack.c.l.b16 %v1437
    %v1541 = vunpack.c.l.b16 %v1438
    %v1542 = vunpack.c.l.b16 %v1439
    %v1543 = vunpack.c.l.b16 %v1440
    %v1544 = vunpack.c.l.b16 %v1441
    %v1545 = vunpack.c.l.b16 %v1442
    %v1546 = vunpack.c.l.b16 %v1443
    %v1547 = vunpack.c.l.b16 %v1444
    %v1548 = vunpack.c.l.b16 %v1445
    %v1549 = vunpack.c.l.b16 %v1446
    %v1550 = vunpack.c.l.b16 %v1447
    %v1551 = vunpack.c.l.b16 %v1448
    %v1552 = vunpack.c.l.b16 %v1449
    %v1553 = vunpack.c.l.b16 %v1450
    %v1554 = vunpack.c.l.b16 %v1451
    %v1555 = vunpack.c.l.b16 %v1452
    %v1556 = vunpack.c.l.b16 %v1453
    %v1557 = vunpack.c.l.b16 %v1454
    %v1558 = vunpack.c.l.b16 %v1455
    %v1559 = vunpack.c.l.b16 %v1456
    %v1560 = vunpack.c.l.b16 %v1457
    %v1561 = vunpack.c.l.b16 %v1458
    %v1562 = vunpack.c.l.b16 %v1459
    %v1563 = vunpack.c.l.b16 %v1460
    %v1564 = vunpack.c.l.b16 %v1461
    %v1565 = vunpack.c.l.b16 %v1462
    %v1566 = vunpack.c.l.b16 %v1463
    %v1567 = vunpack.c.l.b16 %v1464
    %v1568 = vunpack.c.l.b16 %v1465
    %v1569 = vunpack.c.l.b16 %v1466
    %v1570 = vunpack.c.l.b16 %v1467
    %v1571 = vunpack.c.l.b16 %v1468
    %v1572 = vunpack.c.l.b16 %v1469
    %v1573 = vunpack.c.l.b16 %v1470
    %v1574 = vunpack.c.l.b16 %v1471
    %v1575 = vunpack.c.l.b16 %v1472
    %v1576 = vunpack.c.l.b16 %v1473
    %v1577 = vunpack.c.l.b16 %v1474
    %v1578 = vunpack.c.l.b16 %v1475
    %v1579 = vunpack.c.l.b16 %v1476
    %v1580 = vunpack.c.l.b16 %v1477
    %v1581 = vunpack.c.l.b16 %v1478
    %v1582 = vunpack.c.l.b16 %v1479
    %v1583 = vunpack.c.l.b16 %v1480
    %v1584 = vunpack.c.l.b16 %v1481
    %v1585 = vpack.c.b16 %v1538, %v1537
    %v1586 = vpack.c.b16 %v1540, %v1539
    %v1587 = vpack.c.b16 %v1542, %v1541
    %v1588 = vpack.c.b16 %v1544, %v1543
    %v1589 = vpack.c.b16 %v1546, %v1545
    %v1590 = vpack.c.b16 %v1548, %v1547
    %v1591 = vpack.c.b16 %v1550, %v1549
    %v1592 = vpack.c.b16 %v1552, %v1551
    %v1593 = vpack.c.b16 %v1554, %v1553
    %v1594 = vpack.c.b16 %v1556, %v1555
    %v1595 = vpack.c.b16 %v1558, %v1557
    %v1596 = vpack.c.b16 %v1560, %v1559
    %v1597 = vpack.c.b16 %v1562, %v1561
    %v1598 = vpack.c.b16 %v1564, %v1563
    %v1599 = vpack.c.b16 %v1566, %v1565
    %v1600 = vpack.c.b16 %v1568, %v1567
    %v1601 = vpack.c.b16 %v1570, %v1569
    %v1602 = vpack.c.b16 %v1572, %v1571
    %v1603 = vpack.c.b16 %v1574, %v1573
    %v1604 = vpack.c.b16 %v1576, %v1575
    %v1605 = vpack.c.b16 %v1578, %v1577
    %v1606 = vpack.c.b16 %v1580, %v1579
    %v1607 = vpack.c.b16 %v1582, %v1581
    %v1608 = vpack.c.b16 %v1584, %v1583
    %1633 = vmatprep.subr.bf16.mxu0 0
    %1634 = vmatpush1.bf16.msra.mxu0 %v1592
    %1635 = vmatprep.subr.bf16.mxu0 0
    %1636 = vmatpush1.bf16.msra.mxu0 %v1591
    %1637 = vmatprep.subr.bf16.mxu0 0
    %1638 = vmatpush1.bf16.msra.mxu0 %v1590
    %1639 = vmatprep.subr.bf16.mxu0 0
    %1640 = vmatpush1.bf16.msra.mxu0 %v1589
    %1641 = vmatprep.subr.bf16.mxu0 0
    %1642 = vmatpush1.bf16.msra.mxu0 %v1588
    %1643 = vmatprep.subr.bf16.mxu0 0
    %1644 = vmatpush1.bf16.msra.mxu0 %v1587
    %1645 = vmatprep.subr.bf16.mxu0 0
    %1646 = vmatpush1.bf16.msra.mxu0 %v1586
    %1647 = vmatprep.subr.bf16.mxu0 0
    %1648 = vmatpush1.bf16.msra.mxu0 %v1585
    %1649 = vmatprep.subr.bf16.mxu0 0
    %1650 = vmatpush2.bf16.msra.mxu0 %v1600
    %1651 = vmatprep.subr.bf16.mxu0 0
    %1652 = vmatpush2.bf16.msra.mxu0 %v1599
    %1653 = vmatprep.subr.bf16.mxu0 0
    %1654 = vmatpush2.bf16.msra.mxu0 %v1598
    %1655 = vmatprep.subr.bf16.mxu0 0
    %1656 = vmatpush2.bf16.msra.mxu0 %v1597
    %1657 = vmatprep.subr.bf16.mxu0 0
    %1658 = vmatpush2.bf16.msra.mxu0 %v1596
    %1659 = vmatprep.subr.bf16.mxu0 0
    %1660 = vmatpush2.bf16.msra.mxu0 %v1595
    %1661 = vmatprep.subr.bf16.mxu0 0
    %1662 = vmatpush2.bf16.msra.mxu0 %v1594
    %1663 = vmatprep.subr.bf16.mxu0 0
    %1664 = vmatpush2.bf16.msra.mxu0 %v1593
    %1665 = vmatprep.mubr.bf16.mxu0 %v276
    %1666 = vmatmul.mubr.bf16.gmra.mxu0 %v275
    %v1667 = vpop.f32.mrf.mxu0
    %v1668 = vadd.f32 %v1487, %v1667
    %v1669 = vpop.f32.mrf.mxu0
    %v1670 = vpop.f32.mrf.mxu0
    %v1671 = vpop.f32.mrf.mxu0
    %1672 = vdwg.mxu0
    %1673 = vmatprep.subr.bf16.mxu0 0
    %1674 = vmatpush1.bf16.msra.mxu0 %v1608
    %1675 = vmatprep.subr.bf16.mxu0 0
    %1676 = vmatpush1.bf16.msra.mxu0 %v1607
    %1677 = vmatprep.subr.bf16.mxu0 0
    %1678 = vmatpush1.bf16.msra.mxu0 %v1606
    %1679 = vmatprep.subr.bf16.mxu0 0
    %1680 = vmatpush1.bf16.msra.mxu0 %v1605
    %1681 = vmatprep.subr.bf16.mxu0 0
    %1682 = vmatpush1.bf16.msra.mxu0 %v1604
    %1683 = vmatprep.subr.bf16.mxu0 0
    %1684 = vmatpush1.bf16.msra.mxu0 %v1603
    %1685 = vmatprep.subr.bf16.mxu0 0
    %1686 = vmatpush1.bf16.msra.mxu0 %v1602
    %1687 = vmatprep.subr.bf16.mxu0 0
    %1688 = vmatpush1.bf16.msra.mxu0 %v1601
    %1689 = vmatprep.subr.bf16.mxu0 0
    %1690 = vmatpush2.bf16.msra.mxu0 0
    %1691 = vmatprep.subr.bf16.mxu0 0
    %1692 = vmatpush2.bf16.msra.mxu0 0
    %1693 = vmatprep.subr.bf16.mxu0 0
    %1694 = vmatpush2.bf16.msra.mxu0 0
    %1695 = vmatprep.subr.bf16.mxu0 0
    %1696 = vmatpush2.bf16.msra.mxu0 0
    %1697 = vmatprep.subr.bf16.mxu0 0
    %1698 = vmatpush2.bf16.msra.mxu0 0
    %1699 = vmatprep.subr.bf16.mxu0 0
    %1700 = vmatpush2.bf16.msra.mxu0 0
    %1701 = vmatprep.subr.bf16.mxu0 0
    %1702 = vmatpush2.bf16.msra.mxu0 0
    %1703 = vmatprep.subr.bf16.mxu0 0
    %1704 = vmatpush2.bf16.msra.mxu0 0
    %1705 = vmatprep.mubr.bf16.mxu0 0
    %1706 = vmatmul.mubr.bf16.gmra.mxu0 %v277
    %v1707 = vpop.f32.mrf.mxu0
    %v1708 = vadd.f32 %v1668, %v1707
    %v1709 = vpop.f32.mrf.mxu0
    %v1710 = vpop.f32.mrf.mxu0
    %v1711 = vpop.f32.mrf.mxu0
    %1712 = vdwg.mxu0
    %v1713 = vmax.f32 %v1708, 0.0
    %v1714 = vpack.c.bf16 %v1713, %v1713
    %v1715 = vld [vmem:[#allocation7 + $0xc0] sm:$0xf]
    %v1716 = vld [vmem:[#allocation7 + $0xc4] sm:$0xf]
    %v1717 = vld [vmem:[#allocation7 + $0xc8] sm:$0xf]
    %v1718 = vld [vmem:[#allocation7 + $0xcc] sm:$0xf]
    %v1719 = vld [vmem:[#allocation7 + $0xd0] sm:$0xf]
    %v1720 = vld [vmem:[#allocation7 + $0xd4] sm:$0xf]
    %v1721 = vld [vmem:[#allocation7 + $0xd8] sm:$0xf]
    %v1722 = vld [vmem:[#allocation7 + $0xdc] sm:$0xf]
    %v1723 = vld [vmem:[#allocation7 + $0xe0] sm:$0xf]
    %v1724 = vld [vmem:[#allocation7 + $0xe4] sm:$0xf]
    %v1725 = vld [vmem:[#allocation7 + $0xe8] sm:$0xf]
    %v1726 = vld [vmem:[#allocation7 + $0xec] sm:$0xf]
    %v1727 = vld [vmem:[#allocation7 + $0xf0] sm:$0xf]
    %v1728 = vld [vmem:[#allocation7 + $0xf4] sm:$0xf]
    %v1729 = vld [vmem:[#allocation7 + $0xf8] sm:$0xf]
    %v1730 = vld [vmem:[#allocation7 + $0xfc] sm:$0xf]
    %v1747 = vunpack.c.l.b16 %v1715
    %v1748 = vunpack.c.l.b16 %v1716
    %v1749 = vunpack.c.l.b16 %v1717
    %v1750 = vunpack.c.l.b16 %v1718
    %v1751 = vunpack.c.l.b16 %v1719
    %v1752 = vunpack.c.l.b16 %v1720
    %v1753 = vunpack.c.l.b16 %v1721
    %v1754 = vunpack.c.l.b16 %v1722
    %v1755 = vunpack.c.l.b16 %v1723
    %v1756 = vunpack.c.l.b16 %v1724
    %v1757 = vunpack.c.l.b16 %v1725
    %v1758 = vunpack.c.l.b16 %v1726
    %v1759 = vunpack.c.l.b16 %v1727
    %v1760 = vunpack.c.l.b16 %v1728
    %v1761 = vunpack.c.l.b16 %v1729
    %v1762 = vunpack.c.l.b16 %v1730
    %v1763 = vpack.c.b16 %v1748, %v1747
    %v1764 = vpack.c.b16 %v1750, %v1749
    %v1765 = vpack.c.b16 %v1752, %v1751
    %v1766 = vpack.c.b16 %v1754, %v1753
    %v1767 = vpack.c.b16 %v1756, %v1755
    %v1768 = vpack.c.b16 %v1758, %v1757
    %v1769 = vpack.c.b16 %v1760, %v1759
    %v1770 = vpack.c.b16 %v1762, %v1761
    %1779 = vmatprep.subr.bf16.mxu0 0
    %1780 = vmatpush1.bf16.msra.mxu0 %v1770
    %1781 = vmatprep.subr.bf16.mxu0 0
    %1782 = vmatpush1.bf16.msra.mxu0 %v1769
    %1783 = vmatprep.subr.bf16.mxu0 0
    %1784 = vmatpush1.bf16.msra.mxu0 %v1768
    %1785 = vmatprep.subr.bf16.mxu0 0
    %1786 = vmatpush1.bf16.msra.mxu0 %v1767
    %1787 = vmatprep.subr.bf16.mxu0 0
    %1788 = vmatpush1.bf16.msra.mxu0 %v1766
    %1789 = vmatprep.subr.bf16.mxu0 0
    %1790 = vmatpush1.bf16.msra.mxu0 %v1765
    %1791 = vmatprep.subr.bf16.mxu0 0
    %1792 = vmatpush1.bf16.msra.mxu0 %v1764
    %1793 = vmatprep.subr.bf16.mxu0 0
    %1794 = vmatpush1.bf16.msra.mxu0 %v1763
    %1795 = vmatprep.subr.bf16.mxu0 0
    %1796 = vmatpush2.bf16.msra.mxu0 0
    %1797 = vmatprep.subr.bf16.mxu0 0
    %1798 = vmatpush2.bf16.msra.mxu0 0
    %1799 = vmatprep.subr.bf16.mxu0 0
    %1800 = vmatpush2.bf16.msra.mxu0 0
    %1801 = vmatprep.subr.bf16.mxu0 0
    %1802 = vmatpush2.bf16.msra.mxu0 0
    %1803 = vmatprep.subr.bf16.mxu0 0
    %1804 = vmatpush2.bf16.msra.mxu0 0
    %1805 = vmatprep.subr.bf16.mxu0 0
    %1806 = vmatpush2.bf16.msra.mxu0 0
    %1807 = vmatprep.subr.bf16.mxu0 0
    %1808 = vmatpush2.bf16.msra.mxu0 0
    %1809 = vmatprep.subr.bf16.mxu0 0
    %1810 = vmatpush2.bf16.msra.mxu0 0
    %1811 = vmatprep.mubr.bf16.mxu0 0
    %1812 = vmatmul.mubr.bf16.gmra.mxu0 %v1714
    %v1813 = vpop.f32.mrf.mxu0
    %v1814 = vadd.f32 0.0, %v1813
    %v1815 = vpop.f32.mrf.mxu0
    %v1816 = vpop.f32.mrf.mxu0
    %v1817 = vpop.f32.mrf.mxu0
    %1818 = vdwg.mxu0
    %v1819 = vadd.f32 %v1433, %v1814
    %v1820 = vld [vmem:[%s6] sm:$0x1]
    %v1822 = vlaneseq
    %v1823 = vshrl.u32 %v1822, 7
    %v1824 = vsub.s32 0, %v1823
    %v1825 = vrot.slane %v1820, %v1824
    %v1827 = vadd.f32 %v1819, %v1825
    %v1828 = vsel %vm181, %v1827, -inf
    %1829 = vmax.xlane.f32.xlu0 %v1828
    %v1830 = vpop.xlane.xlu0 %1829
    %v1831 = vsub.f32 %v1827, %v1830
    %v1832 = vmul.f32 %v1831, 1.442695
    %v1833 = vpow.pop %v1832
    %v1834 = vsel %vm181, %v1833, 0.0
    %1835 = vadd.xlane.f32.xlu0 %v1834
    %v1836 = vpop.xlane.xlu0 %1835
    %v1837 = vlog2.pop %v1836
    %v1838 = vmul.f32 %v1837, 0.6931472
    %v1839 = vsub.f32 %v1831, %v1838
    %1840 = vst [vmem:[#allocation8] sm:$0x3] %v1839
    // Predicated region
    $region42: #{_lambda_.1} parent=1 // pred_check
      _
    $region43: #{_lambda_.1} parent=1 // pred_check_branch
      %1842 = sbr.rel (0) target = $region45
    $region44: #{_lambda_.1} parent=1 // pred_region
      %s1844 = ssub.s32 32, 32
      %1845 = vsyncadd [#allocation4], %s1844
      %s1847 = sshll.u32 [#allocation8], 4
      %s1848 = int_to_ptr.vmem [resolvable:$true] %s1847
      %1850 = dma.vmem_to_hbm [thread:$0]  %s1848, 32, %s7, [#allocation4]
    $region45: #{_lambda_.1} parent=1 // pred_fallthru
      _
    // Predicated region
    $region46: #{_lambda_.1} parent=1 // pred_check
      _
    $region47: #{_lambda_.1} parent=1 // pred_check_branch
      %1852 = sbr.rel (0) target = $region49
    $region48: #{_lambda_.1} parent=1 // pred_region
      %1853 = dma.done [#allocation4], 32
    $region49: #{_lambda_.1} parent=1 // pred_fallthru
      _
    %1854 = vsyncpa [#allocation3], 1
    %1855 = vsyncpa [#allocation6], 1
    %1856 = vsyncpa [#allocation4], 1

</llo_original>
